<compile_context>
chip_gen: v5e
topology: v5e:2x2
jax: 0.10.0
libtpu: 0.0.40
codegen_flags: <defaults>
</compile_context>

<pallas_src>
import jax
import jax.numpy as jnp
from jax.experimental import pallas as pl
from jax.experimental.pallas import tpu as pltpu

# ----------------------------- model sizes ---------------------------------
VOCAB_SIZE = 100
EMB_DIM = 128
GRU_DIM = 128
FC_HID_DIM = 128
NUM_CLASS = 8
C_PAD = 128            # lane-dense padded class dim
BATCH = 2
SEQ = 8
NEG_BIG = -1e9         # bias for padded (fake) classes


# ------------------------------ Pallas kernel -------------------------------
def gru_classifier_kernel(
    x_ref,                                   # (T*B, E)  bf16, time-major rows
    wih_f_ref, whh_f_ref, bihf_ref, bhhfn_ref,   # forward GRU (biases folded)
    wih_b_ref, bihb_ref, bhhbn_ref,              # backward GRU (no whh_b: h0=0)
    wfc1f_ref, wfc1b_ref, bfc1_ref,              # _hid_fc2 split into halves
    wfc2_ref, bfc2_ref,                          # _output_fc (padded to C_PAD)
    logits_ref, softmax_ref,                     # outputs (B, C_PAD) f32
):
    H = whh_f_ref.shape[0]
    B = logits_ref.shape[0]
    TB = x_ref.shape[0]
    T = TB // B
    f32 = jnp.float32
    bf16 = jnp.bfloat16

    x_all = x_ref[...]                                           # (T*B, E) bf16

    # ---- hoisted input projection: one big MXU matmul, off the serial path.
    # bihf_ref already contains b_ih + [b_hr, b_hz, 0] (n-gate hidden bias is
    # applied separately through r).
    gi_all = (
        jnp.dot(x_all, wih_f_ref[...], preferred_element_type=f32)
        + bihf_ref[...]
    )                                                            # (T*B, 3H) f32

    bhh_fn = bhhfn_ref[...]                                      # (1, H)

    def first_step(gi, bhh_n):
        # h_{t-1} == 0  =>  gh == 0 ; recurrent r/z biases already folded in gi.
        r = jax.nn.sigmoid(gi[:, 0:H])
        z = jax.nn.sigmoid(gi[:, H:2 * H])
        n = jnp.tanh(gi[:, 2 * H:3 * H] + r * bhh_n)
        return (1.0 - z) * n

    # ---- forward direction: peeled first step + fully unrolled scan --------
    h = first_step(gi_all[0:B], bhh_fn)                          # (B, H) f32
    whh_f = whh_f_ref[...]                                       # (H, 3H) bf16
    for t in range(1, T):                                        # static unroll
        gi = gi_all[t * B:(t + 1) * B]                           # (B, 3H) f32
        gh = jnp.dot(h.astype(bf16), whh_f, preferred_element_type=f32)
        r = jax.nn.sigmoid(gi[:, 0:H] + gh[:, 0:H])
        z = jax.nn.sigmoid(gi[:, H:2 * H] + gh[:, H:2 * H])
        n = jnp.tanh(gi[:, 2 * H:3 * H] + r * (gh[:, 2 * H:3 * H] + bhh_fn))
        h = (1.0 - z) * n + z * h
    h_fwd = h

    # ---- backward direction @ position T-1 == single reverse step, h0 = 0 --
    x_last = x_all[(T - 1) * B:T * B]                            # (B, E) bf16
    gi_b = (
        jnp.dot(x_last, wih_b_ref[...], preferred_element_type=f32)
        + bihb_ref[...]
    )
    h_bwd = first_step(gi_b, bhhbn_ref[...])                     # (B, H) f32

    # ---- FC head: split wfc1 instead of concatenating [h_fwd, h_bwd] -------
    hidden = jnp.tanh(
        jnp.dot(h_fwd.astype(bf16), wfc1f_ref[...], preferred_element_type=f32)
        + jnp.dot(h_bwd.astype(bf16), wfc1b_ref[...], preferred_element_type=f32)
        + bfc1_ref[...]
    )                                                            # (B, F) f32
    logits = (
        jnp.dot(hidden.astype(bf16), wfc2_ref[...], preferred_element_type=f32)
        + bfc2_ref[...]
    )                                                            # (B, C_PAD)

    logits_ref[...] = logits
    m = jnp.max(logits, axis=-1, keepdims=True)
    e = jnp.exp(logits - m)
    softmax_ref[...] = e * pl.reciprocal(
        jnp.sum(e, axis=-1, keepdims=True), approx=True
    )


# --------------------------- param preprocessing -----------------------------
def prepare_kernel_params(p):
    H = GRU_DIM
    bf16 = jnp.bfloat16

    def fold_bias(bih, bhh):
        # fold recurrent bias for r and z gates; n-gate hidden bias stays separate
        folded = bih.at[:, :2 * H].add(bhh[:, :2 * H])
        return folded, bhh[:, 2 * H:3 * H]

    bihf_fold, bhhf_n = fold_bias(p["bih_f"], p["bhh_f"])
    bihb_fold, bhhb_n = fold_bias(p["bih_b"], p["bhh_b"])

    # pad output FC to a full lane width; padded classes get a huge negative bias
    wfc2_pad = jnp.zeros((FC_HID_DIM, C_PAD), jnp.float32)
    wfc2_pad = wfc2_pad.at[:, :NUM_CLASS].set(p["wfc2"])
    bfc2_pad = jnp.full((1, C_PAD), NEG_BIG, jnp.float32)
    bfc2_pad = bfc2_pad.at[:, :NUM_CLASS].set(p["bfc2"])

    return (
        p["wih_f"].astype(bf16), p["whh_f"].astype(bf16), bihf_fold, bhhf_n,
        p["wih_b"].astype(bf16), bihb_fold, bhhb_n,                # whh_b dropped
        p["wfc1"][:H].astype(bf16), p["wfc1"][H:].astype(bf16), p["bfc1"],
        wfc2_pad.astype(bf16), bfc2_pad,
    )


# ------------------------------ wrapper -------------------------------------
def gru_classifier_forward(input_ids, params):
    """input_ids: (B, T) int32 token ids."""
    # Embedding lookup is glue (gather) in plain JAX; kernel gets (T*B, E).
    x_emb = params["emb"][input_ids]                     # (B, T, E) f32
    B, T, E = x_emb.shape
    x2d = (
        jnp.transpose(x_emb, (1, 0, 2))                  # (T, B, E) time-major
        .reshape(T * B, E)
        .astype(jnp.bfloat16)
    )

    kparams = prepare_kernel_params(params)

    vmem = pl.BlockSpec(memory_space=pltpu.MemorySpace.VMEM)
    n_in = 1 + len(kparams)

    logits_pad, softmax_pad = pl.pallas_call(
        gru_classifier_kernel,
        out_shape=(
            jax.ShapeDtypeStruct((B, C_PAD), jnp.float32),
            jax.ShapeDtypeStruct((B, C_PAD), jnp.float32),
        ),
        in_specs=[vmem] * n_in,
        out_specs=(vmem, vmem),
    )(x2d, *kparams)

    return {
        "sent_logits": logits_pad[:, :NUM_CLASS],
        "sent_softmax": softmax_pad[:, :NUM_CLASS],
    }


def init_params(key):
    ks = jax.random.split(key, 16)
    s = 0.02
    p = {
        # embedding table (nn.Embedding(vocab, emb_dim))
        "emb": jax.random.normal(ks[0], (VOCAB_SIZE, EMB_DIM), jnp.float32) * s,
        # forward GRU (weights stored transposed: (in, 3H), gate order [r,z,n])
        "wih_f": jax.random.normal(ks[1], (EMB_DIM, 3 * GRU_DIM), jnp.float32) * s,
        "whh_f": jax.random.normal(ks[2], (GRU_DIM, 3 * GRU_DIM), jnp.float32) * s,
        "bih_f": jax.random.normal(ks[3], (1, 3 * GRU_DIM), jnp.float32) * s,
        "bhh_f": jax.random.normal(ks[4], (1, 3 * GRU_DIM), jnp.float32) * s,
        # backward GRU (whh_b kept in params for parity but unused by the
        # kernel since only its first reverse step (h0=0) is ever needed)
        "wih_b": jax.random.normal(ks[5], (EMB_DIM, 3 * GRU_DIM), jnp.float32) * s,
        "whh_b": jax.random.normal(ks[6], (GRU_DIM, 3 * GRU_DIM), jnp.float32) * s,
        "bih_b": jax.random.normal(ks[7], (1, 3 * GRU_DIM), jnp.float32) * s,
        "bhh_b": jax.random.normal(ks[8], (1, 3 * GRU_DIM), jnp.float32) * s,
        # _hid_fc2: Linear(2*gru_dim, fc_hid_dim)
        "wfc1": jax.random.normal(ks[9], (2 * GRU_DIM, FC_HID_DIM), jnp.float32) * s,
        "bfc1": jax.random.normal(ks[10], (1, FC_HID_DIM), jnp.float32) * s,
        # _output_fc: Linear(fc_hid_dim, num_class)
        "wfc2": jax.random.normal(ks[11], (FC_HID_DIM, NUM_CLASS), jnp.float32) * s,
        "bfc2": jax.random.normal(ks[12], (1, NUM_CLASS), jnp.float32) * s,
    }
    return p


if __name__ == "__main__":
    key = jax.random.PRNGKey(0)
    params = init_params(key)

    # Deterministic token ids (B, T)
    input_ids = jax.random.randint(
        jax.random.PRNGKey(1), (BATCH, SEQ), 0, VOCAB_SIZE, dtype=jnp.int32
    )

    out = gru_classifier_forward(input_ids, params)
    jax.block_until_ready(out)

    assert out["sent_logits"].shape == (BATCH, NUM_CLASS)
    assert out["sent_softmax"].shape == (BATCH, NUM_CLASS)
    # softmax rows sum to ~1 (approx-reciprocal + bf16 matmuls -> relaxed tol)
    assert jnp.allclose(jnp.sum(out["sent_softmax"], axis=-1), 1.0, atol=1e-2)

    # TODO(synk): compute_loss (NLL on log-softmax) is training-only and not
    # part of the inference hot path; omitted from the kernel.
    print("KERNEL_OK")
</pallas_src>

<mosaic_0001>
module attributes {stable_mosaic.version = 11 : i64} {
  func.func @gru_classifier_kernel(%arg0: memref<16x128xbf16, #tpu.memory_space<vmem>>, %arg1: memref<128x384xbf16, #tpu.memory_space<vmem>>, %arg2: memref<128x384xbf16, #tpu.memory_space<vmem>>, %arg3: memref<1x384xf32, #tpu.memory_space<vmem>>, %arg4: memref<1x128xf32, #tpu.memory_space<vmem>>, %arg5: memref<128x384xbf16, #tpu.memory_space<vmem>>, %arg6: memref<1x384xf32, #tpu.memory_space<vmem>>, %arg7: memref<1x128xf32, #tpu.memory_space<vmem>>, %arg8: memref<128x128xbf16, #tpu.memory_space<vmem>>, %arg9: memref<128x128xbf16, #tpu.memory_space<vmem>>, %arg10: memref<1x128xf32, #tpu.memory_space<vmem>>, %arg11: memref<128x128xbf16, #tpu.memory_space<vmem>>, %arg12: memref<1x128xf32, #tpu.memory_space<vmem>>, %arg13: memref<2x128xf32, #tpu.memory_space<vmem>>, %arg14: memref<2x128xf32, #tpu.memory_space<vmem>>) attributes {dimension_semantics = [], scalar_prefetch = 0 : i64, scratch_operands = 0 : i64, tpu.core_type = #tpu.core_type<tc>} {
    %c0 = arith.constant 0 : index
    %c0_0 = arith.constant 0 : index
    %0 = vector.load %arg0[%c0, %c0_0] : memref<16x128xbf16, #tpu.memory_space<vmem>>, vector<16x128xbf16>
    %c0_1 = arith.constant 0 : index
    %c0_2 = arith.constant 0 : index
    %1 = vector.load %arg1[%c0_1, %c0_2] : memref<128x384xbf16, #tpu.memory_space<vmem>>, vector<128x384xbf16>
    %cst = arith.constant dense<0.000000e+00> : vector<16x384xf32>
    %2 = tpu.matmul %0, %1, %cst {dimension_numbers = #tpu.dot_dimension_numbers<[1], [0], [0], [1], [0, 0, 1, 1], [], []>} : vector<16x128xbf16>, vector<128x384xbf16>, vector<16x384xf32> -> vector<16x384xf32>
    %c0_3 = arith.constant 0 : index
    %c0_4 = arith.constant 0 : index
    %3 = vector.load %arg3[%c0_3, %c0_4] : memref<1x384xf32, #tpu.memory_space<vmem>>, vector<1x384xf32>
    %4 = vector.broadcast %3 : vector<1x384xf32> to vector<16x384xf32>
    %5 = arith.addf %2, %4 : vector<16x384xf32>
    %c0_5 = arith.constant 0 : index
    %c0_6 = arith.constant 0 : index
    %6 = vector.load %arg4[%c0_5, %c0_6] : memref<1x128xf32, #tpu.memory_space<vmem>>, vector<1x128xf32>
    %7 = vector.extract_strided_slice %5 {offsets = [0, 0], sizes = [2, 384], strides = [1, 1]} : vector<16x384xf32> to vector<2x384xf32>
    %8 = vector.extract_strided_slice %7 {offsets = [0, 0], sizes = [2, 128], strides = [1, 1]} : vector<2x384xf32> to vector<2x128xf32>
    %9 = arith.negf %8 : vector<2x128xf32>
    %10 = math.exp %9 : vector<2x128xf32>
    %cst_7 = arith.constant 1.000000e+00 : f32
    %11 = vector.broadcast %cst_7 : f32 to vector<2x128xf32>
    %12 = arith.addf %11, %10 : vector<2x128xf32>
    %13 = arith.divf %11, %12 : vector<2x128xf32>
    %14 = vector.extract_strided_slice %7 {offsets = [0, 128], sizes = [2, 128], strides = [1, 1]} : vector<2x384xf32> to vector<2x128xf32>
    %15 = arith.negf %14 : vector<2x128xf32>
    %16 = math.exp %15 : vector<2x128xf32>
    %cst_8 = arith.constant 1.000000e+00 : f32
    %17 = vector.broadcast %cst_8 : f32 to vector<2x128xf32>
    %18 = arith.addf %17, %16 : vector<2x128xf32>
    %19 = arith.divf %17, %18 : vector<2x128xf32>
    %20 = vector.extract_strided_slice %7 {offsets = [0, 256], sizes = [2, 128], strides = [1, 1]} : vector<2x384xf32> to vector<2x128xf32>
    %21 = vector.broadcast %6 : vector<1x128xf32> to vector<2x128xf32>
    %22 = arith.mulf %13, %21 : vector<2x128xf32>
    %23 = arith.addf %20, %22 : vector<2x128xf32>
    %24 = math.tanh %23 : vector<2x128xf32>
    %cst_9 = arith.constant 1.000000e+00 : f32
    %25 = vector.broadcast %cst_9 : f32 to vector<2x128xf32>
    %26 = arith.subf %25, %19 : vector<2x128xf32>
    %27 = arith.mulf %26, %24 : vector<2x128xf32>
    %c0_10 = arith.constant 0 : index
    %c0_11 = arith.constant 0 : index
    %28 = vector.load %arg2[%c0_10, %c0_11] : memref<128x384xbf16, #tpu.memory_space<vmem>>, vector<128x384xbf16>
    %29 = vector.extract_strided_slice %5 {offsets = [2, 0], sizes = [2, 384], strides = [1, 1]} : vector<16x384xf32> to vector<2x384xf32>
    %30 = arith.truncf %27 : vector<2x128xf32> to vector<2x128xbf16>
    %cst_12 = arith.constant dense<0.000000e+00> : vector<2x384xf32>
    %31 = tpu.matmul %30, %28, %cst_12 {dimension_numbers = #tpu.dot_dimension_numbers<[1], [0], [0], [1], [0, 0, 1, 1], [], []>} : vector<2x128xbf16>, vector<128x384xbf16>, vector<2x384xf32> -> vector<2x384xf32>
    %32 = vector.extract_strided_slice %29 {offsets = [0, 0], sizes = [2, 128], strides = [1, 1]} : vector<2x384xf32> to vector<2x128xf32>
    %33 = vector.extract_strided_slice %31 {offsets = [0, 0], sizes = [2, 128], strides = [1, 1]} : vector<2x384xf32> to vector<2x128xf32>
    %34 = arith.addf %32, %33 : vector<2x128xf32>
    %35 = arith.negf %34 : vector<2x128xf32>
    %36 = math.exp %35 : vector<2x128xf32>
    %cst_13 = arith.constant 1.000000e+00 : f32
    %37 = vector.broadcast %cst_13 : f32 to vector<2x128xf32>
    %38 = arith.addf %37, %36 : vector<2x128xf32>
    %39 = arith.divf %37, %38 : vector<2x128xf32>
    %40 = vector.extract_strided_slice %29 {offsets = [0, 128], sizes = [2, 128], strides = [1, 1]} : vector<2x384xf32> to vector<2x128xf32>
    %41 = vector.extract_strided_slice %31 {offsets = [0, 128], sizes = [2, 128], strides = [1, 1]} : vector<2x384xf32> to vector<2x128xf32>
    %42 = arith.addf %40, %41 : vector<2x128xf32>
    %43 = arith.negf %42 : vector<2x128xf32>
    %44 = math.exp %43 : vector<2x128xf32>
    %cst_14 = arith.constant 1.000000e+00 : f32
    %45 = vector.broadcast %cst_14 : f32 to vector<2x128xf32>
    %46 = arith.addf %45, %44 : vector<2x128xf32>
    %47 = arith.divf %45, %46 : vector<2x128xf32>
    %48 = vector.extract_strided_slice %29 {offsets = [0, 256], sizes = [2, 128], strides = [1, 1]} : vector<2x384xf32> to vector<2x128xf32>
    %49 = vector.extract_strided_slice %31 {offsets = [0, 256], sizes = [2, 128], strides = [1, 1]} : vector<2x384xf32> to vector<2x128xf32>
    %50 = vector.broadcast %6 : vector<1x128xf32> to vector<2x128xf32>
    %51 = arith.addf %49, %50 : vector<2x128xf32>
    %52 = arith.mulf %39, %51 : vector<2x128xf32>
    %53 = arith.addf %48, %52 : vector<2x128xf32>
    %54 = math.tanh %53 : vector<2x128xf32>
    %cst_15 = arith.constant 1.000000e+00 : f32
    %55 = vector.broadcast %cst_15 : f32 to vector<2x128xf32>
    %56 = arith.subf %55, %47 : vector<2x128xf32>
    %57 = arith.mulf %56, %54 : vector<2x128xf32>
    %58 = arith.mulf %47, %27 : vector<2x128xf32>
    %59 = arith.addf %57, %58 : vector<2x128xf32>
    %60 = vector.extract_strided_slice %5 {offsets = [4, 0], sizes = [2, 384], strides = [1, 1]} : vector<16x384xf32> to vector<2x384xf32>
    %61 = arith.truncf %59 : vector<2x128xf32> to vector<2x128xbf16>
    %cst_16 = arith.constant dense<0.000000e+00> : vector<2x384xf32>
    %62 = tpu.matmul %61, %28, %cst_16 {dimension_numbers = #tpu.dot_dimension_numbers<[1], [0], [0], [1], [0, 0, 1, 1], [], []>} : vector<2x128xbf16>, vector<128x384xbf16>, vector<2x384xf32> -> vector<2x384xf32>
    %63 = vector.extract_strided_slice %60 {offsets = [0, 0], sizes = [2, 128], strides = [1, 1]} : vector<2x384xf32> to vector<2x128xf32>
    %64 = vector.extract_strided_slice %62 {offsets = [0, 0], sizes = [2, 128], strides = [1, 1]} : vector<2x384xf32> to vector<2x128xf32>
    %65 = arith.addf %63, %64 : vector<2x128xf32>
    %66 = arith.negf %65 : vector<2x128xf32>
    %67 = math.exp %66 : vector<2x128xf32>
    %cst_17 = arith.constant 1.000000e+00 : f32
    %68 = vector.broadcast %cst_17 : f32 to vector<2x128xf32>
    %69 = arith.addf %68, %67 : vector<2x128xf32>
    %70 = arith.divf %68, %69 : vector<2x128xf32>
    %71 = vector.extract_strided_slice %60 {offsets = [0, 128], sizes = [2, 128], strides = [1, 1]} : vector<2x384xf32> to vector<2x128xf32>
    %72 = vector.extract_strided_slice %62 {offsets = [0, 128], sizes = [2, 128], strides = [1, 1]} : vector<2x384xf32> to vector<2x128xf32>
    %73 = arith.addf %71, %72 : vector<2x128xf32>
    %74 = arith.negf %73 : vector<2x128xf32>
    %75 = math.exp %74 : vector<2x128xf32>
    %cst_18 = arith.constant 1.000000e+00 : f32
    %76 = vector.broadcast %cst_18 : f32 to vector<2x128xf32>
    %77 = arith.addf %76, %75 : vector<2x128xf32>
    %78 = arith.divf %76, %77 : vector<2x128xf32>
    %79 = vector.extract_strided_slice %60 {offsets = [0, 256], sizes = [2, 128], strides = [1, 1]} : vector<2x384xf32> to vector<2x128xf32>
    %80 = vector.extract_strided_slice %62 {offsets = [0, 256], sizes = [2, 128], strides = [1, 1]} : vector<2x384xf32> to vector<2x128xf32>
    %81 = vector.broadcast %6 : vector<1x128xf32> to vector<2x128xf32>
    %82 = arith.addf %80, %81 : vector<2x128xf32>
    %83 = arith.mulf %70, %82 : vector<2x128xf32>
    %84 = arith.addf %79, %83 : vector<2x128xf32>
    %85 = math.tanh %84 : vector<2x128xf32>
    %cst_19 = arith.constant 1.000000e+00 : f32
    %86 = vector.broadcast %cst_19 : f32 to vector<2x128xf32>
    %87 = arith.subf %86, %78 : vector<2x128xf32>
    %88 = arith.mulf %87, %85 : vector<2x128xf32>
    %89 = arith.mulf %78, %59 : vector<2x128xf32>
    %90 = arith.addf %88, %89 : vector<2x128xf32>
    %91 = vector.extract_strided_slice %5 {offsets = [6, 0], sizes = [2, 384], strides = [1, 1]} : vector<16x384xf32> to vector<2x384xf32>
    %92 = arith.truncf %90 : vector<2x128xf32> to vector<2x128xbf16>
    %cst_20 = arith.constant dense<0.000000e+00> : vector<2x384xf32>
    %93 = tpu.matmul %92, %28, %cst_20 {dimension_numbers = #tpu.dot_dimension_numbers<[1], [0], [0], [1], [0, 0, 1, 1], [], []>} : vector<2x128xbf16>, vector<128x384xbf16>, vector<2x384xf32> -> vector<2x384xf32>
    %94 = vector.extract_strided_slice %91 {offsets = [0, 0], sizes = [2, 128], strides = [1, 1]} : vector<2x384xf32> to vector<2x128xf32>
    %95 = vector.extract_strided_slice %93 {offsets = [0, 0], sizes = [2, 128], strides = [1, 1]} : vector<2x384xf32> to vector<2x128xf32>
    %96 = arith.addf %94, %95 : vector<2x128xf32>
    %97 = arith.negf %96 : vector<2x128xf32>
    %98 = math.exp %97 : vector<2x128xf32>
    %cst_21 = arith.constant 1.000000e+00 : f32
    %99 = vector.broadcast %cst_21 : f32 to vector<2x128xf32>
    %100 = arith.addf %99, %98 : vector<2x128xf32>
    %101 = arith.divf %99, %100 : vector<2x128xf32>
    %102 = vector.extract_strided_slice %91 {offsets = [0, 128], sizes = [2, 128], strides = [1, 1]} : vector<2x384xf32> to vector<2x128xf32>
    %103 = vector.extract_strided_slice %93 {offsets = [0, 128], sizes = [2, 128], strides = [1, 1]} : vector<2x384xf32> to vector<2x128xf32>
    %104 = arith.addf %102, %103 : vector<2x128xf32>
    %105 = arith.negf %104 : vector<2x128xf32>
    %106 = math.exp %105 : vector<2x128xf32>
    %cst_22 = arith.constant 1.000000e+00 : f32
    %107 = vector.broadcast %cst_22 : f32 to vector<2x128xf32>
    %108 = arith.addf %107, %106 : vector<2x128xf32>
    %109 = arith.divf %107, %108 : vector<2x128xf32>
    %110 = vector.extract_strided_slice %91 {offsets = [0, 256], sizes = [2, 128], strides = [1, 1]} : vector<2x384xf32> to vector<2x128xf32>
    %111 = vector.extract_strided_slice %93 {offsets = [0, 256], sizes = [2, 128], strides = [1, 1]} : vector<2x384xf32> to vector<2x128xf32>
    %112 = vector.broadcast %6 : vector<1x128xf32> to vector<2x128xf32>
    %113 = arith.addf %111, %112 : vector<2x128xf32>
    %114 = arith.mulf %101, %113 : vector<2x128xf32>
    %115 = arith.addf %110, %114 : vector<2x128xf32>
    %116 = math.tanh %115 : vector<2x128xf32>
    %cst_23 = arith.constant 1.000000e+00 : f32
    %117 = vector.broadcast %cst_23 : f32 to vector<2x128xf32>
    %118 = arith.subf %117, %109 : vector<2x128xf32>
    %119 = arith.mulf %118, %116 : vector<2x128xf32>
    %120 = arith.mulf %109, %90 : vector<2x128xf32>
    %121 = arith.addf %119, %120 : vector<2x128xf32>
    %122 = vector.extract_strided_slice %5 {offsets = [8, 0], sizes = [2, 384], strides = [1, 1]} : vector<16x384xf32> to vector<2x384xf32>
    %123 = arith.truncf %121 : vector<2x128xf32> to vector<2x128xbf16>
    %cst_24 = arith.constant dense<0.000000e+00> : vector<2x384xf32>
    %124 = tpu.matmul %123, %28, %cst_24 {dimension_numbers = #tpu.dot_dimension_numbers<[1], [0], [0], [1], [0, 0, 1, 1], [], []>} : vector<2x128xbf16>, vector<128x384xbf16>, vector<2x384xf32> -> vector<2x384xf32>
    %125 = vector.extract_strided_slice %122 {offsets = [0, 0], sizes = [2, 128], strides = [1, 1]} : vector<2x384xf32> to vector<2x128xf32>
    %126 = vector.extract_strided_slice %124 {offsets = [0, 0], sizes = [2, 128], strides = [1, 1]} : vector<2x384xf32> to vector<2x128xf32>
    %127 = arith.addf %125, %126 : vector<2x128xf32>
    %128 = arith.negf %127 : vector<2x128xf32>
    %129 = math.exp %128 : vector<2x128xf32>
    %cst_25 = arith.constant 1.000000e+00 : f32
    %130 = vector.broadcast %cst_25 : f32 to vector<2x128xf32>
    %131 = arith.addf %130, %129 : vector<2x128xf32>
    %132 = arith.divf %130, %131 : vector<2x128xf32>
    %133 = vector.extract_strided_slice %122 {offsets = [0, 128], sizes = [2, 128], strides = [1, 1]} : vector<2x384xf32> to vector<2x128xf32>
    %134 = vector.extract_strided_slice %124 {offsets = [0, 128], sizes = [2, 128], strides = [1, 1]} : vector<2x384xf32> to vector<2x128xf32>
    %135 = arith.addf %133, %134 : vector<2x128xf32>
    %136 = arith.negf %135 : vector<2x128xf32>
    %137 = math.exp %136 : vector<2x128xf32>
    %cst_26 = arith.constant 1.000000e+00 : f32
    %138 = vector.broadcast %cst_26 : f32 to vector<2x128xf32>
    %139 = arith.addf %138, %137 : vector<2x128xf32>
    %140 = arith.divf %138, %139 : vector<2x128xf32>
    %141 = vector.extract_strided_slice %122 {offsets = [0, 256], sizes = [2, 128], strides = [1, 1]} : vector<2x384xf32> to vector<2x128xf32>
    %142 = vector.extract_strided_slice %124 {offsets = [0, 256], sizes = [2, 128], strides = [1, 1]} : vector<2x384xf32> to vector<2x128xf32>
    %143 = vector.broadcast %6 : vector<1x128xf32> to vector<2x128xf32>
    %144 = arith.addf %142, %143 : vector<2x128xf32>
    %145 = arith.mulf %132, %144 : vector<2x128xf32>
    %146 = arith.addf %141, %145 : vector<2x128xf32>
    %147 = math.tanh %146 : vector<2x128xf32>
    %cst_27 = arith.constant 1.000000e+00 : f32
    %148 = vector.broadcast %cst_27 : f32 to vector<2x128xf32>
    %149 = arith.subf %148, %140 : vector<2x128xf32>
    %150 = arith.mulf %149, %147 : vector<2x128xf32>
    %151 = arith.mulf %140, %121 : vector<2x128xf32>
    %152 = arith.addf %150, %151 : vector<2x128xf32>
    %153 = vector.extract_strided_slice %5 {offsets = [10, 0], sizes = [2, 384], strides = [1, 1]} : vector<16x384xf32> to vector<2x384xf32>
    %154 = arith.truncf %152 : vector<2x128xf32> to vector<2x128xbf16>
    %cst_28 = arith.constant dense<0.000000e+00> : vector<2x384xf32>
    %155 = tpu.matmul %154, %28, %cst_28 {dimension_numbers = #tpu.dot_dimension_numbers<[1], [0], [0], [1], [0, 0, 1, 1], [], []>} : vector<2x128xbf16>, vector<128x384xbf16>, vector<2x384xf32> -> vector<2x384xf32>
    %156 = vector.extract_strided_slice %153 {offsets = [0, 0], sizes = [2, 128], strides = [1, 1]} : vector<2x384xf32> to vector<2x128xf32>
    %157 = vector.extract_strided_slice %155 {offsets = [0, 0], sizes = [2, 128], strides = [1, 1]} : vector<2x384xf32> to vector<2x128xf32>
    %158 = arith.addf %156, %157 : vector<2x128xf32>
    %159 = arith.negf %158 : vector<2x128xf32>
    %160 = math.exp %159 : vector<2x128xf32>
    %cst_29 = arith.constant 1.000000e+00 : f32
    %161 = vector.broadcast %cst_29 : f32 to vector<2x128xf32>
    %162 = arith.addf %161, %160 : vector<2x128xf32>
    %163 = arith.divf %161, %162 : vector<2x128xf32>
    %164 = vector.extract_strided_slice %153 {offsets = [0, 128], sizes = [2, 128], strides = [1, 1]} : vector<2x384xf32> to vector<2x128xf32>
    %165 = vector.extract_strided_slice %155 {offsets = [0, 128], sizes = [2, 128], strides = [1, 1]} : vector<2x384xf32> to vector<2x128xf32>
    %166 = arith.addf %164, %165 : vector<2x128xf32>
    %167 = arith.negf %166 : vector<2x128xf32>
    %168 = math.exp %167 : vector<2x128xf32>
    %cst_30 = arith.constant 1.000000e+00 : f32
    %169 = vector.broadcast %cst_30 : f32 to vector<2x128xf32>
    %170 = arith.addf %169, %168 : vector<2x128xf32>
    %171 = arith.divf %169, %170 : vector<2x128xf32>
    %172 = vector.extract_strided_slice %153 {offsets = [0, 256], sizes = [2, 128], strides = [1, 1]} : vector<2x384xf32> to vector<2x128xf32>
    %173 = vector.extract_strided_slice %155 {offsets = [0, 256], sizes = [2, 128], strides = [1, 1]} : vector<2x384xf32> to vector<2x128xf32>
    %174 = vector.broadcast %6 : vector<1x128xf32> to vector<2x128xf32>
    %175 = arith.addf %173, %174 : vector<2x128xf32>
    %176 = arith.mulf %163, %175 : vector<2x128xf32>
    %177 = arith.addf %172, %176 : vector<2x128xf32>
    %178 = math.tanh %177 : vector<2x128xf32>
    %cst_31 = arith.constant 1.000000e+00 : f32
    %179 = vector.broadcast %cst_31 : f32 to vector<2x128xf32>
    %180 = arith.subf %179, %171 : vector<2x128xf32>
    %181 = arith.mulf %180, %178 : vector<2x128xf32>
    %182 = arith.mulf %171, %152 : vector<2x128xf32>
    %183 = arith.addf %181, %182 : vector<2x128xf32>
    %184 = vector.extract_strided_slice %5 {offsets = [12, 0], sizes = [2, 384], strides = [1, 1]} : vector<16x384xf32> to vector<2x384xf32>
    %185 = arith.truncf %183 : vector<2x128xf32> to vector<2x128xbf16>
    %cst_32 = arith.constant dense<0.000000e+00> : vector<2x384xf32>
    %186 = tpu.matmul %185, %28, %cst_32 {dimension_numbers = #tpu.dot_dimension_numbers<[1], [0], [0], [1], [0, 0, 1, 1], [], []>} : vector<2x128xbf16>, vector<128x384xbf16>, vector<2x384xf32> -> vector<2x384xf32>
    %187 = vector.extract_strided_slice %184 {offsets = [0, 0], sizes = [2, 128], strides = [1, 1]} : vector<2x384xf32> to vector<2x128xf32>
    %188 = vector.extract_strided_slice %186 {offsets = [0, 0], sizes = [2, 128], strides = [1, 1]} : vector<2x384xf32> to vector<2x128xf32>
    %189 = arith.addf %187, %188 : vector<2x128xf32>
    %190 = arith.negf %189 : vector<2x128xf32>
    %191 = math.exp %190 : vector<2x128xf32>
    %cst_33 = arith.constant 1.000000e+00 : f32
    %192 = vector.broadcast %cst_33 : f32 to vector<2x128xf32>
    %193 = arith.addf %192, %191 : vector<2x128xf32>
    %194 = arith.divf %192, %193 : vector<2x128xf32>
    %195 = vector.extract_strided_slice %184 {offsets = [0, 128], sizes = [2, 128], strides = [1, 1]} : vector<2x384xf32> to vector<2x128xf32>
    %196 = vector.extract_strided_slice %186 {offsets = [0, 128], sizes = [2, 128], strides = [1, 1]} : vector<2x384xf32> to vector<2x128xf32>
    %197 = arith.addf %195, %196 : vector<2x128xf32>
    %198 = arith.negf %197 : vector<2x128xf32>
    %199 = math.exp %198 : vector<2x128xf32>
    %cst_34 = arith.constant 1.000000e+00 : f32
    %200 = vector.broadcast %cst_34 : f32 to vector<2x128xf32>
    %201 = arith.addf %200, %199 : vector<2x128xf32>
    %202 = arith.divf %200, %201 : vector<2x128xf32>
    %203 = vector.extract_strided_slice %184 {offsets = [0, 256], sizes = [2, 128], strides = [1, 1]} : vector<2x384xf32> to vector<2x128xf32>
    %204 = vector.extract_strided_slice %186 {offsets = [0, 256], sizes = [2, 128], strides = [1, 1]} : vector<2x384xf32> to vector<2x128xf32>
    %205 = vector.broadcast %6 : vector<1x128xf32> to vector<2x128xf32>
    %206 = arith.addf %204, %205 : vector<2x128xf32>
    %207 = arith.mulf %194, %206 : vector<2x128xf32>
    %208 = arith.addf %203, %207 : vector<2x128xf32>
    %209 = math.tanh %208 : vector<2x128xf32>
    %cst_35 = arith.constant 1.000000e+00 : f32
    %210 = vector.broadcast %cst_35 : f32 to vector<2x128xf32>
    %211 = arith.subf %210, %202 : vector<2x128xf32>
    %212 = arith.mulf %211, %209 : vector<2x128xf32>
    %213 = arith.mulf %202, %183 : vector<2x128xf32>
    %214 = arith.addf %212, %213 : vector<2x128xf32>
    %215 = vector.extract_strided_slice %5 {offsets = [14, 0], sizes = [2, 384], strides = [1, 1]} : vector<16x384xf32> to vector<2x384xf32>
    %216 = arith.truncf %214 : vector<2x128xf32> to vector<2x128xbf16>
    %cst_36 = arith.constant dense<0.000000e+00> : vector<2x384xf32>
    %217 = tpu.matmul %216, %28, %cst_36 {dimension_numbers = #tpu.dot_dimension_numbers<[1], [0], [0], [1], [0, 0, 1, 1], [], []>} : vector<2x128xbf16>, vector<128x384xbf16>, vector<2x384xf32> -> vector<2x384xf32>
    %218 = vector.extract_strided_slice %215 {offsets = [0, 0], sizes = [2, 128], strides = [1, 1]} : vector<2x384xf32> to vector<2x128xf32>
    %219 = vector.extract_strided_slice %217 {offsets = [0, 0], sizes = [2, 128], strides = [1, 1]} : vector<2x384xf32> to vector<2x128xf32>
    %220 = arith.addf %218, %219 : vector<2x128xf32>
    %221 = arith.negf %220 : vector<2x128xf32>
    %222 = math.exp %221 : vector<2x128xf32>
    %cst_37 = arith.constant 1.000000e+00 : f32
    %223 = vector.broadcast %cst_37 : f32 to vector<2x128xf32>
    %224 = arith.addf %223, %222 : vector<2x128xf32>
    %225 = arith.divf %223, %224 : vector<2x128xf32>
    %226 = vector.extract_strided_slice %215 {offsets = [0, 128], sizes = [2, 128], strides = [1, 1]} : vector<2x384xf32> to vector<2x128xf32>
    %227 = vector.extract_strided_slice %217 {offsets = [0, 128], sizes = [2, 128], strides = [1, 1]} : vector<2x384xf32> to vector<2x128xf32>
    %228 = arith.addf %226, %227 : vector<2x128xf32>
    %229 = arith.negf %228 : vector<2x128xf32>
    %230 = math.exp %229 : vector<2x128xf32>
    %cst_38 = arith.constant 1.000000e+00 : f32
    %231 = vector.broadcast %cst_38 : f32 to vector<2x128xf32>
    %232 = arith.addf %231, %230 : vector<2x128xf32>
    %233 = arith.divf %231, %232 : vector<2x128xf32>
    %234 = vector.extract_strided_slice %215 {offsets = [0, 256], sizes = [2, 128], strides = [1, 1]} : vector<2x384xf32> to vector<2x128xf32>
    %235 = vector.extract_strided_slice %217 {offsets = [0, 256], sizes = [2, 128], strides = [1, 1]} : vector<2x384xf32> to vector<2x128xf32>
    %236 = vector.broadcast %6 : vector<1x128xf32> to vector<2x128xf32>
    %237 = arith.addf %235, %236 : vector<2x128xf32>
    %238 = arith.mulf %225, %237 : vector<2x128xf32>
    %239 = arith.addf %234, %238 : vector<2x128xf32>
    %240 = math.tanh %239 : vector<2x128xf32>
    %cst_39 = arith.constant 1.000000e+00 : f32
    %241 = vector.broadcast %cst_39 : f32 to vector<2x128xf32>
    %242 = arith.subf %241, %233 : vector<2x128xf32>
    %243 = arith.mulf %242, %240 : vector<2x128xf32>
    %244 = arith.mulf %233, %214 : vector<2x128xf32>
    %245 = arith.addf %243, %244 : vector<2x128xf32>
    %246 = vector.extract_strided_slice %0 {offsets = [14, 0], sizes = [2, 128], strides = [1, 1]} : vector<16x128xbf16> to vector<2x128xbf16>
    %c0_40 = arith.constant 0 : index
    %c0_41 = arith.constant 0 : index
    %247 = vector.load %arg5[%c0_40, %c0_41] : memref<128x384xbf16, #tpu.memory_space<vmem>>, vector<128x384xbf16>
    %cst_42 = arith.constant dense<0.000000e+00> : vector<2x384xf32>
    %248 = tpu.matmul %246, %247, %cst_42 {dimension_numbers = #tpu.dot_dimension_numbers<[1], [0], [0], [1], [0, 0, 1, 1], [], []>} : vector<2x128xbf16>, vector<128x384xbf16>, vector<2x384xf32> -> vector<2x384xf32>
    %c0_43 = arith.constant 0 : index
    %c0_44 = arith.constant 0 : index
    %249 = vector.load %arg6[%c0_43, %c0_44] : memref<1x384xf32, #tpu.memory_space<vmem>>, vector<1x384xf32>
    %250 = vector.broadcast %249 : vector<1x384xf32> to vector<2x384xf32>
    %251 = arith.addf %248, %250 : vector<2x384xf32>
    %c0_45 = arith.constant 0 : index
    %c0_46 = arith.constant 0 : index
    %252 = vector.load %arg7[%c0_45, %c0_46] : memref<1x128xf32, #tpu.memory_space<vmem>>, vector<1x128xf32>
    %253 = vector.extract_strided_slice %251 {offsets = [0, 0], sizes = [2, 128], strides = [1, 1]} : vector<2x384xf32> to vector<2x128xf32>
    %254 = arith.negf %253 : vector<2x128xf32>
    %255 = math.exp %254 : vector<2x128xf32>
    %cst_47 = arith.constant 1.000000e+00 : f32
    %256 = vector.broadcast %cst_47 : f32 to vector<2x128xf32>
    %257 = arith.addf %256, %255 : vector<2x128xf32>
    %258 = arith.divf %256, %257 : vector<2x128xf32>
    %259 = vector.extract_strided_slice %251 {offsets = [0, 128], sizes = [2, 128], strides = [1, 1]} : vector<2x384xf32> to vector<2x128xf32>
    %260 = arith.negf %259 : vector<2x128xf32>
    %261 = math.exp %260 : vector<2x128xf32>
    %cst_48 = arith.constant 1.000000e+00 : f32
    %262 = vector.broadcast %cst_48 : f32 to vector<2x128xf32>
    %263 = arith.addf %262, %261 : vector<2x128xf32>
    %264 = arith.divf %262, %263 : vector<2x128xf32>
    %265 = vector.extract_strided_slice %251 {offsets = [0, 256], sizes = [2, 128], strides = [1, 1]} : vector<2x384xf32> to vector<2x128xf32>
    %266 = vector.broadcast %252 : vector<1x128xf32> to vector<2x128xf32>
    %267 = arith.mulf %258, %266 : vector<2x128xf32>
    %268 = arith.addf %265, %267 : vector<2x128xf32>
    %269 = math.tanh %268 : vector<2x128xf32>
    %cst_49 = arith.constant 1.000000e+00 : f32
    %270 = vector.broadcast %cst_49 : f32 to vector<2x128xf32>
    %271 = arith.subf %270, %264 : vector<2x128xf32>
    %272 = arith.mulf %271, %269 : vector<2x128xf32>
    %273 = arith.truncf %245 : vector<2x128xf32> to vector<2x128xbf16>
    %c0_50 = arith.constant 0 : index
    %c0_51 = arith.constant 0 : index
    %274 = vector.load %arg8[%c0_50, %c0_51] : memref<128x128xbf16, #tpu.memory_space<vmem>>, vector<128x128xbf16>
    %cst_52 = arith.constant dense<0.000000e+00> : vector<2x128xf32>
    %275 = tpu.matmul %273, %274, %cst_52 {dimension_numbers = #tpu.dot_dimension_numbers<[1], [0], [0], [1], [0, 0, 1, 1], [], []>} : vector<2x128xbf16>, vector<128x128xbf16>, vector<2x128xf32> -> vector<2x128xf32>
    %276 = arith.truncf %272 : vector<2x128xf32> to vector<2x128xbf16>
    %c0_53 = arith.constant 0 : index
    %c0_54 = arith.constant 0 : index
    %277 = vector.load %arg9[%c0_53, %c0_54] : memref<128x128xbf16, #tpu.memory_space<vmem>>, vector<128x128xbf16>
    %cst_55 = arith.constant dense<0.000000e+00> : vector<2x128xf32>
    %278 = tpu.matmul %276, %277, %cst_55 {dimension_numbers = #tpu.dot_dimension_numbers<[1], [0], [0], [1], [0, 0, 1, 1], [], []>} : vector<2x128xbf16>, vector<128x128xbf16>, vector<2x128xf32> -> vector<2x128xf32>
    %279 = arith.addf %275, %278 : vector<2x128xf32>
    %c0_56 = arith.constant 0 : index
    %c0_57 = arith.constant 0 : index
    %280 = vector.load %arg10[%c0_56, %c0_57] : memref<1x128xf32, #tpu.memory_space<vmem>>, vector<1x128xf32>
    %281 = vector.broadcast %280 : vector<1x128xf32> to vector<2x128xf32>
    %282 = arith.addf %279, %281 : vector<2x128xf32>
    %283 = math.tanh %282 : vector<2x128xf32>
    %284 = arith.truncf %283 : vector<2x128xf32> to vector<2x128xbf16>
    %c0_58 = arith.constant 0 : index
    %c0_59 = arith.constant 0 : index
    %285 = vector.load %arg11[%c0_58, %c0_59] : memref<128x128xbf16, #tpu.memory_space<vmem>>, vector<128x128xbf16>
    %cst_60 = arith.constant dense<0.000000e+00> : vector<2x128xf32>
    %286 = tpu.matmul %284, %285, %cst_60 {dimension_numbers = #tpu.dot_dimension_numbers<[1], [0], [0], [1], [0, 0, 1, 1], [], []>} : vector<2x128xbf16>, vector<128x128xbf16>, vector<2x128xf32> -> vector<2x128xf32>
    %c0_61 = arith.constant 0 : index
    %c0_62 = arith.constant 0 : index
    %287 = vector.load %arg12[%c0_61, %c0_62] : memref<1x128xf32, #tpu.memory_space<vmem>>, vector<1x128xf32>
    %288 = vector.broadcast %287 : vector<1x128xf32> to vector<2x128xf32>
    %289 = arith.addf %286, %288 : vector<2x128xf32>
    %c0_63 = arith.constant 0 : index
    %c0_64 = arith.constant 0 : index
    %290 = vector.load %arg13[%c0_63, %c0_64] : memref<2x128xf32, #tpu.memory_space<vmem>>, vector<2x128xf32>
    tpu.vector_store %arg13[%c0_63, %c0_64], %289 {strides = array<i32>} : memref<2x128xf32, #tpu.memory_space<vmem>>, vector<2x128xf32>,
    %cst_65 = arith.constant dense<0xFF800000> : vector<2xf32>
    %291 = vector.multi_reduction <maximumf>, %289, %cst_65 [1] : vector<2x128xf32> to vector<2xf32>
    %292 = vector.shape_cast %291 : vector<2xf32> to vector<2x1xf32>
    %293 = vector.broadcast %292 : vector<2x1xf32> to vector<2x128xf32>
    %294 = arith.subf %289, %293 : vector<2x128xf32>
    %295 = math.exp %294 : vector<2x128xf32>
    %cst_66 = arith.constant dense<0.000000e+00> : vector<2xf32>
    %296 = vector.multi_reduction <add>, %295, %cst_66 [1] : vector<2x128xf32> to vector<2xf32>
    %297 = vector.shape_cast %296 : vector<2xf32> to vector<2x1xf32>
    %298 = tpu.reciprocal %297 {approx = true} : vector<2x1xf32> -> vector<2x1xf32>
    %299 = vector.broadcast %298 : vector<2x1xf32> to vector<2x128xf32>
    %300 = arith.mulf %295, %299 : vector<2x128xf32>
    %c0_67 = arith.constant 0 : index
    %c0_68 = arith.constant 0 : index
    %301 = vector.load %arg14[%c0_67, %c0_68] : memref<2x128xf32, #tpu.memory_space<vmem>>, vector<2x128xf32>
    tpu.vector_store %arg14[%c0_67, %c0_68], %300 {strides = array<i32>} : memref<2x128xf32, #tpu.memory_space<vmem>>, vector<2x128xf32>,
    return
  }
}

</mosaic_0001>

<llo_original>
// kernel: tpu_custom_call.1
$region0: #{tpu_custom_call.1}
  #allocation0 [shape = 'u32[]', space=smem, size = 0x4, offset = 0x4, fixed_abs, tag = 'smem constant byte address 0x4 - core index']
  #allocation1 [shape = 'u32[72,128]{1,0:T(1,128)}', space=vmem, size = 0x9000, scoped, tag = 'internal scratch']
  %s0 = inlined_call_operand.hbm [shape: bf16[16,128], index: 0, kind: input, shape index: {}]
  %s1 = inlined_call_operand.hbm [shape: bf16[128,384], index: 1, kind: input, shape index: {}]
  %s2 = inlined_call_operand.hbm [shape: bf16[128,384], index: 2, kind: input, shape index: {}]
  %s3 = inlined_call_operand.hbm [shape: f32[1,384], index: 3, kind: input, shape index: {}]
  %s4 = inlined_call_operand.vmem [shape: f32[1,128], index: 4, kind: input, shape index: {}]
  %s5 = inlined_call_operand.hbm [shape: bf16[128,384], index: 5, kind: input, shape index: {}]
  %s6 = inlined_call_operand.vmem [shape: f32[1,384], index: 6, kind: input, shape index: {}]
  %s7 = inlined_call_operand.vmem [shape: f32[1,128], index: 7, kind: input, shape index: {}]
  %s8 = inlined_call_operand.hbm [shape: bf16[128,128], index: 8, kind: input, shape index: {}]
  %s9 = inlined_call_operand.hbm [shape: bf16[128,128], index: 9, kind: input, shape index: {}]
  %s10 = inlined_call_operand.vmem [shape: f32[1,128], index: 10, kind: input, shape index: {}]
  %s11 = inlined_call_operand.hbm [shape: bf16[128,128], index: 11, kind: input, shape index: {}]
  %s12 = inlined_call_operand.vmem [shape: f32[1,128], index: 12, kind: input, shape index: {}]
  %s13 = inlined_call_operand.hbm [shape: f32[2,128], index: 13, kind: output, shape index: {0}]
  %s14 = inlined_call_operand.hbm [shape: f32[2,128], index: 14, kind: output, shape index: {1}]
  %15 = xla_tuple %s13, %s14
  %s16 = sld [smem:[#allocation0]]
  $region102: #{tpu_custom_call.1} parent=0
    _
  %s18 = ssub.s32 1, %s16
  %s19 = scalar_select 0, %s18, %s16
  $region1: #{tpu_custom_call.1} parent=0
    #allocation2 [shape = 'u8[4096]{0}', space=vmem, size = 0x1000, scoped, tag = 'input window, operand 0, single buffered']
    #allocation3 [shape = 's32[1]{0}', space=sflag, size = 0x4, scoped, tag = 'scoped memory for tpu_custom_call.1']
    #allocation4 [shape = 's32[1]{0}', space=sflag, size = 0x4, scoped, tag = 'scoped memory for tpu_custom_call.1']
    #allocation5 [shape = 'u8[98304]{0}', space=vmem, size = 0x18000, scoped, tag = 'input window, operand 1, single buffered']
    #allocation6 [shape = 's32[1]{0}', space=sflag, size = 0x4, scoped, tag = 'scoped memory for tpu_custom_call.1']
    #allocation7 [shape = 'u8[98304]{0}', space=vmem, size = 0x18000, scoped, tag = 'input window, operand 2, single buffered']
    #allocation8 [shape = 'u8[1536]{0}', space=vmem, size = 0x800, scoped, tag = 'input window, operand 3, single buffered']
    #allocation9 [shape = 's32[1]{0}', space=sflag, size = 0x4, scoped, tag = 'scoped memory for tpu_custom_call.1']
    #allocation10 [shape = 'u8[98304]{0}', space=vmem, size = 0x18000, scoped, tag = 'input window, operand 5, single buffered']
    #allocation11 [shape = 'u8[32768]{0}', space=vmem, size = 0x8000, scoped, tag = 'input window, operand 8, single buffered']
    #allocation12 [shape = 's32[1]{0}', space=sflag, size = 0x4, scoped, tag = 'scoped memory for tpu_custom_call.1']
    #allocation13 [shape = 'u8[32768]{0}', space=vmem, size = 0x8000, scoped, tag = 'input window, operand 9, single buffered']
    #allocation14 [shape = 'u8[32768]{0}', space=vmem, size = 0x8000, scoped, tag = 'input window, operand 11, single buffered']
    #allocation15 [shape = 's32[1]{0}', space=sflag, size = 0x4, scoped, tag = 'scoped memory for tpu_custom_call.1']
    #allocation16 [shape = 'u8[1024]{0}', space=vmem, size = 0x400, scoped, tag = 'output window, operand 0, single buffered']
    #allocation17 [shape = 'u8[1024]{0}', space=vmem, size = 0x400, scoped, tag = 'output window, operand 1, single buffered']
    #allocation18 [shape = 's32[1]{0}', space=sflag, size = 0x4, scoped, tag = 'scoped memory for tpu_custom_call.1']
    %20 = vsyncpa [#allocation3], 0
    %21 = vsyncpa [#allocation6], 0
    %22 = vsyncpa [#allocation9], 0
    %23 = vsyncpa [#allocation12], 0
    %24 = vsyncpa [#allocation15], 0
    %25 = vsyncpa [#allocation4], 0
    %26 = vsyncpa [#allocation18], 0
    // Predicated region
    $region2: #{tpu_custom_call.1} parent=1 // pred_check
      _
    $region3: #{tpu_custom_call.1} parent=1 // pred_check_branch
      %28 = sbr.rel (0) target = $region5
    $region4: #{tpu_custom_call.1} parent=1 // pred_region
      %30 = vsyncadd [#allocation3], 0
      %s31 = sshll.u32 %s0, 4
      %s32 = int_to_ptr.hbm [resolvable:$true] %s31
      %s33 = sshll.u32 [#allocation2], 4
      %s34 = int_to_ptr.vmem [resolvable:$true] %s33
      %39 = dma.hbm_to_vmem [thread:$0]  %s32, 128, %s34, [#allocation3], 64, 64, 4
    $region5: #{tpu_custom_call.1} parent=1 // pred_fallthru
      _
    // Predicated region
    $region6: #{tpu_custom_call.1} parent=1 // pred_check
      _
    $region7: #{tpu_custom_call.1} parent=1 // pred_check_branch
      %41 = sbr.rel (0) target = $region9
    $region8: #{tpu_custom_call.1} parent=1 // pred_region
      %43 = vsyncadd [#allocation6], 0
      %s44 = sshll.u32 %s1, 4
      %s45 = int_to_ptr.hbm [resolvable:$true] %s44
      %s46 = sshll.u32 [#allocation5], 4
      %s47 = int_to_ptr.vmem [resolvable:$true] %s46
      %52 = dma.hbm_to_vmem [thread:$0]  %s45, 3072, %s47, [#allocation6], 192, 192, 12
    $region9: #{tpu_custom_call.1} parent=1 // pred_fallthru
      _
    // Predicated region
    $region10: #{tpu_custom_call.1} parent=1 // pred_check
      _
    $region11: #{tpu_custom_call.1} parent=1 // pred_check_branch
      %54 = sbr.rel (0) target = $region13
    $region12: #{tpu_custom_call.1} parent=1 // pred_region
      %56 = vsyncadd [#allocation6], 0
      %s57 = sshll.u32 %s2, 4
      %s58 = int_to_ptr.hbm [resolvable:$true] %s57
      %s59 = sshll.u32 [#allocation7], 4
      %s60 = int_to_ptr.vmem [resolvable:$true] %s59
      %65 = dma.hbm_to_vmem [thread:$0]  %s58, 3072, %s60, [#allocation6], 192, 192, 12
    $region13: #{tpu_custom_call.1} parent=1 // pred_fallthru
      _
    // Predicated region
    $region14: #{tpu_custom_call.1} parent=1 // pred_check
      _
    $region15: #{tpu_custom_call.1} parent=1 // pred_check_branch
      %67 = sbr.rel (0) target = $region17
    $region16: #{tpu_custom_call.1} parent=1 // pred_region
      %69 = vsyncadd [#allocation9], 0
      %s71 = sshll.u32 %s3, 4
      %s72 = int_to_ptr.hbm [resolvable:$true] %s71
      %s73 = sshll.u32 [#allocation8], 4
      %s74 = int_to_ptr.vmem [resolvable:$true] %s73
      %76 = dma.hbm_to_vmem [thread:$0]  %s72, 48, %s74, [#allocation9]
    $region17: #{tpu_custom_call.1} parent=1 // pred_fallthru
      _
    // Predicated region
    $region18: #{tpu_custom_call.1} parent=1 // pred_check
      _
    $region19: #{tpu_custom_call.1} parent=1 // pred_check_branch
      %78 = sbr.rel (0) target = $region21
    $region20: #{tpu_custom_call.1} parent=1 // pred_region
      _
    $region21: #{tpu_custom_call.1} parent=1 // pred_fallthru
      _
    // Predicated region
    $region22: #{tpu_custom_call.1} parent=1 // pred_check
      _
    $region23: #{tpu_custom_call.1} parent=1 // pred_check_branch
      %80 = sbr.rel (0) target = $region25
    $region24: #{tpu_custom_call.1} parent=1 // pred_region
      %82 = vsyncadd [#allocation9], 0
      %s83 = sshll.u32 %s5, 4
      %s84 = int_to_ptr.hbm [resolvable:$true] %s83
      %s85 = sshll.u32 [#allocation10], 4
      %s86 = int_to_ptr.vmem [resolvable:$true] %s85
      %91 = dma.hbm_to_vmem [thread:$0]  %s84, 3072, %s86, [#allocation9], 192, 192, 12
    $region25: #{tpu_custom_call.1} parent=1 // pred_fallthru
      _
    // Predicated region
    $region26: #{tpu_custom_call.1} parent=1 // pred_check
      _
    $region27: #{tpu_custom_call.1} parent=1 // pred_check_branch
      %93 = sbr.rel (0) target = $region29
    $region28: #{tpu_custom_call.1} parent=1 // pred_region
      _
    $region29: #{tpu_custom_call.1} parent=1 // pred_fallthru
      _
    // Predicated region
    $region30: #{tpu_custom_call.1} parent=1 // pred_check
      _
    $region31: #{tpu_custom_call.1} parent=1 // pred_check_branch
      %95 = sbr.rel (0) target = $region33
    $region32: #{tpu_custom_call.1} parent=1 // pred_region
      _
    $region33: #{tpu_custom_call.1} parent=1 // pred_fallthru
      _
    // Predicated region
    $region34: #{tpu_custom_call.1} parent=1 // pred_check
      _
    $region35: #{tpu_custom_call.1} parent=1 // pred_check_branch
      %97 = sbr.rel (0) target = $region37
    $region36: #{tpu_custom_call.1} parent=1 // pred_region
      %99 = vsyncadd [#allocation12], 0
      %s100 = sshll.u32 %s8, 4
      %s101 = int_to_ptr.hbm [resolvable:$true] %s100
      %s102 = sshll.u32 [#allocation11], 4
      %s103 = int_to_ptr.vmem [resolvable:$true] %s102
      %108 = dma.hbm_to_vmem [thread:$0]  %s101, 1024, %s103, [#allocation12], 64, 64, 4
    $region37: #{tpu_custom_call.1} parent=1 // pred_fallthru
      _
    // Predicated region
    $region38: #{tpu_custom_call.1} parent=1 // pred_check
      _
    $region39: #{tpu_custom_call.1} parent=1 // pred_check_branch
      %110 = sbr.rel (0) target = $region41
    $region40: #{tpu_custom_call.1} parent=1 // pred_region
      %112 = vsyncadd [#allocation12], 0
      %s113 = sshll.u32 %s9, 4
      %s114 = int_to_ptr.hbm [resolvable:$true] %s113
      %s115 = sshll.u32 [#allocation13], 4
      %s116 = int_to_ptr.vmem [resolvable:$true] %s115
      %121 = dma.hbm_to_vmem [thread:$0]  %s114, 1024, %s116, [#allocation12], 64, 64, 4
    $region41: #{tpu_custom_call.1} parent=1 // pred_fallthru
      _
    // Predicated region
    $region42: #{tpu_custom_call.1} parent=1 // pred_check
      _
    $region43: #{tpu_custom_call.1} parent=1 // pred_check_branch
      %123 = sbr.rel (0) target = $region45
    $region44: #{tpu_custom_call.1} parent=1 // pred_region
      _
    $region45: #{tpu_custom_call.1} parent=1 // pred_fallthru
      _
    // Predicated region
    $region46: #{tpu_custom_call.1} parent=1 // pred_check
      _
    $region47: #{tpu_custom_call.1} parent=1 // pred_check_branch
      %125 = sbr.rel (0) target = $region49
    $region48: #{tpu_custom_call.1} parent=1 // pred_region
      %127 = vsyncadd [#allocation15], 0
      %s128 = sshll.u32 %s11, 4
      %s129 = int_to_ptr.hbm [resolvable:$true] %s128
      %s130 = sshll.u32 [#allocation14], 4
      %s131 = int_to_ptr.vmem [resolvable:$true] %s130
      %136 = dma.hbm_to_vmem [thread:$0]  %s129, 1024, %s131, [#allocation15], 64, 64, 4
    $region49: #{tpu_custom_call.1} parent=1 // pred_fallthru
      _
    // Predicated region
    $region50: #{tpu_custom_call.1} parent=1 // pred_check
      _
    $region51: #{tpu_custom_call.1} parent=1 // pred_check_branch
      %138 = sbr.rel (0) target = $region53
    $region52: #{tpu_custom_call.1} parent=1 // pred_region
      _
    $region53: #{tpu_custom_call.1} parent=1 // pred_fallthru
      _
    // Predicated region
    $region54: #{tpu_custom_call.1} parent=1 // pred_check
      _
    $region55: #{tpu_custom_call.1} parent=1 // pred_check_branch
      %140 = sbr.rel (0) target = $region57
    $region56: #{tpu_custom_call.1} parent=1 // pred_region
      %142 = dma.done [#allocation3], 128
    $region57: #{tpu_custom_call.1} parent=1 // pred_fallthru
      _
    // Predicated region
    $region58: #{tpu_custom_call.1} parent=1 // pred_check
      _
    $region59: #{tpu_custom_call.1} parent=1 // pred_check_branch
      %144 = sbr.rel (0) target = $region61
    $region60: #{tpu_custom_call.1} parent=1 // pred_region
      %146 = dma.done [#allocation6], 3072
    $region61: #{tpu_custom_call.1} parent=1 // pred_fallthru
      _
    // Predicated region
    $region62: #{tpu_custom_call.1} parent=1 // pred_check
      _
    $region63: #{tpu_custom_call.1} parent=1 // pred_check_branch
      %148 = sbr.rel (0) target = $region65
    $region64: #{tpu_custom_call.1} parent=1 // pred_region
      %150 = dma.done [#allocation6], 3072
    $region65: #{tpu_custom_call.1} parent=1 // pred_fallthru
      _
    // Predicated region
    $region66: #{tpu_custom_call.1} parent=1 // pred_check
      _
    $region67: #{tpu_custom_call.1} parent=1 // pred_check_branch
      %152 = sbr.rel (0) target = $region69
    $region68: #{tpu_custom_call.1} parent=1 // pred_region
      %154 = dma.done [#allocation9], 48
    $region69: #{tpu_custom_call.1} parent=1 // pred_fallthru
      _
    // Predicated region
    $region70: #{tpu_custom_call.1} parent=1 // pred_check
      _
    $region71: #{tpu_custom_call.1} parent=1 // pred_check_branch
      %156 = sbr.rel (0) target = $region73
    $region72: #{tpu_custom_call.1} parent=1 // pred_region
      %158 = dma.done [#allocation9], 3072
    $region73: #{tpu_custom_call.1} parent=1 // pred_fallthru
      _
    // Predicated region
    $region74: #{tpu_custom_call.1} parent=1 // pred_check
      _
    $region75: #{tpu_custom_call.1} parent=1 // pred_check_branch
      %160 = sbr.rel (0) target = $region77
    $region76: #{tpu_custom_call.1} parent=1 // pred_region
      %162 = dma.done [#allocation12], 1024
    $region77: #{tpu_custom_call.1} parent=1 // pred_fallthru
      _
    // Predicated region
    $region78: #{tpu_custom_call.1} parent=1 // pred_check
      _
    $region79: #{tpu_custom_call.1} parent=1 // pred_check_branch
      %164 = sbr.rel (0) target = $region81
    $region80: #{tpu_custom_call.1} parent=1 // pred_region
      %166 = dma.done [#allocation12], 1024
    $region81: #{tpu_custom_call.1} parent=1 // pred_fallthru
      _
    // Predicated region
    $region82: #{tpu_custom_call.1} parent=1 // pred_check
      _
    $region83: #{tpu_custom_call.1} parent=1 // pred_check_branch
      %168 = sbr.rel (0) target = $region85
    $region84: #{tpu_custom_call.1} parent=1 // pred_region
      %170 = dma.done [#allocation15], 1024
    $region85: #{tpu_custom_call.1} parent=1 // pred_fallthru
      _
    %v171 = vld [vmem:[#allocation2] sm:$0xf]
    %v172 = vld [vmem:[#allocation2 + $0x4] sm:$0xf]
    %v173 = vld [vmem:[#allocation5] sm:$0xff]
    %v174 = vld [vmem:[#allocation5 + $0x8] sm:$0xf]
    %v175 = vld [vmem:[#allocation5 + $0xc] sm:$0xff]
    %v176 = vld [vmem:[#allocation5 + $0x14] sm:$0xf]
    %v177 = vld [vmem:[#allocation5 + $0x18] sm:$0xff]
    %v178 = vld [vmem:[#allocation5 + $0x20] sm:$0xf]
    %v179 = vld [vmem:[#allocation5 + $0x24] sm:$0xff]
    %v180 = vld [vmem:[#allocation5 + $0x2c] sm:$0xf]
    %v181 = vld [vmem:[#allocation5 + $0x30] sm:$0xff]
    %v182 = vld [vmem:[#allocation5 + $0x38] sm:$0xf]
    %v183 = vld [vmem:[#allocation5 + $0x3c] sm:$0xff]
    %v184 = vld [vmem:[#allocation5 + $0x44] sm:$0xf]
    %v185 = vld [vmem:[#allocation5 + $0x48] sm:$0xff]
    %v186 = vld [vmem:[#allocation5 + $0x50] sm:$0xf]
    %v187 = vld [vmem:[#allocation5 + $0x54] sm:$0xff]
    %v188 = vld [vmem:[#allocation5 + $0x5c] sm:$0xf]
    %v189 = vld [vmem:[#allocation5 + $0x60] sm:$0xff]
    %v190 = vld [vmem:[#allocation5 + $0x68] sm:$0xf]
    %v191 = vld [vmem:[#allocation5 + $0x6c] sm:$0xff]
    %v192 = vld [vmem:[#allocation5 + $0x74] sm:$0xf]
    %v193 = vld [vmem:[#allocation5 + $0x78] sm:$0xff]
    %v194 = vld [vmem:[#allocation5 + $0x80] sm:$0xf]
    %v195 = vld [vmem:[#allocation5 + $0x84] sm:$0xff]
    %v196 = vld [vmem:[#allocation5 + $0x8c] sm:$0xf]
    %v197 = vld [vmem:[#allocation5 + $0x90] sm:$0xff]
    %v198 = vld [vmem:[#allocation5 + $0x98] sm:$0xf]
    %v199 = vld [vmem:[#allocation5 + $0x9c] sm:$0xff]
    %v200 = vld [vmem:[#allocation5 + $0xa4] sm:$0xf]
    %v201 = vld [vmem:[#allocation5 + $0xa8] sm:$0xff]
    %v202 = vld [vmem:[#allocation5 + $0xb0] sm:$0xf]
    %v203 = vld [vmem:[#allocation5 + $0xb4] sm:$0xff]
    %v204 = vld [vmem:[#allocation5 + $0xbc] sm:$0xf]
    %v205 = vld [vmem:[#allocation8] sm:$0x7]
    %v207 = vperm.slane %v205, 0
    %v208 = vperm.slane %v205, 1
    %v209 = vperm.slane %v205, 2
    %v215 = vunpack.c.l.b16 %v171
    %v216 = vunpack.c.l.b16 %v172
    %v217 = vpack.c.b16 %v216, %v215
    %v251 = vunpack.c.l.b16 %v173
    %v252 = vunpack.c.h.b16 %v173
    %v253 = vunpack.c.l.b16 %v174
    %v254 = vunpack.c.l.b16 %v175
    %v255 = vunpack.c.h.b16 %v175
    %v256 = vunpack.c.l.b16 %v176
    %v257 = vunpack.c.l.b16 %v177
    %v258 = vunpack.c.h.b16 %v177
    %v259 = vunpack.c.l.b16 %v178
    %v260 = vunpack.c.l.b16 %v179
    %v261 = vunpack.c.h.b16 %v179
    %v262 = vunpack.c.l.b16 %v180
    %v263 = vunpack.c.l.b16 %v181
    %v264 = vunpack.c.h.b16 %v181
    %v265 = vunpack.c.l.b16 %v182
    %v266 = vunpack.c.l.b16 %v183
    %v267 = vunpack.c.h.b16 %v183
    %v268 = vunpack.c.l.b16 %v184
    %v269 = vunpack.c.l.b16 %v185
    %v270 = vunpack.c.h.b16 %v185
    %v271 = vunpack.c.l.b16 %v186
    %v272 = vunpack.c.l.b16 %v187
    %v273 = vunpack.c.h.b16 %v187
    %v274 = vunpack.c.l.b16 %v188
    %v275 = vunpack.c.l.b16 %v189
    %v276 = vunpack.c.h.b16 %v189
    %v277 = vunpack.c.l.b16 %v190
    %v278 = vunpack.c.l.b16 %v191
    %v279 = vunpack.c.h.b16 %v191
    %v280 = vunpack.c.l.b16 %v192
    %v281 = vunpack.c.l.b16 %v193
    %v282 = vunpack.c.h.b16 %v193
    %v283 = vunpack.c.l.b16 %v194
    %v284 = vunpack.c.l.b16 %v195
    %v285 = vunpack.c.h.b16 %v195
    %v286 = vunpack.c.l.b16 %v196
    %v287 = vunpack.c.l.b16 %v197
    %v288 = vunpack.c.h.b16 %v197
    %v289 = vunpack.c.l.b16 %v198
    %v290 = vunpack.c.l.b16 %v199
    %v291 = vunpack.c.h.b16 %v199
    %v292 = vunpack.c.l.b16 %v200
    %v293 = vunpack.c.l.b16 %v201
    %v294 = vunpack.c.h.b16 %v201
    %v295 = vunpack.c.l.b16 %v202
    %v296 = vunpack.c.l.b16 %v203
    %v297 = vunpack.c.h.b16 %v203
    %v298 = vunpack.c.l.b16 %v204
    %v299 = vpack.c.b16 %v254, %v251
    %v300 = vpack.c.b16 %v255, %v252
    %v301 = vpack.c.b16 %v256, %v253
    %v302 = vpack.c.b16 %v260, %v257
    %v303 = vpack.c.b16 %v261, %v258
    %v304 = vpack.c.b16 %v262, %v259
    %v305 = vpack.c.b16 %v266, %v263
    %v306 = vpack.c.b16 %v267, %v264
    %v307 = vpack.c.b16 %v268, %v265
    %v308 = vpack.c.b16 %v272, %v269
    %v309 = vpack.c.b16 %v273, %v270
    %v310 = vpack.c.b16 %v274, %v271
    %v311 = vpack.c.b16 %v278, %v275
    %v312 = vpack.c.b16 %v279, %v276
    %v313 = vpack.c.b16 %v280, %v277
    %v314 = vpack.c.b16 %v284, %v281
    %v315 = vpack.c.b16 %v285, %v282
    %v316 = vpack.c.b16 %v286, %v283
    %v317 = vpack.c.b16 %v290, %v287
    %v318 = vpack.c.b16 %v291, %v288
    %v319 = vpack.c.b16 %v292, %v289
    %v320 = vpack.c.b16 %v296, %v293
    %v321 = vpack.c.b16 %v297, %v294
    %v322 = vpack.c.b16 %v298, %v295
    %347 = vmatpush.bf16.msra.mxu0 %v320
    %348 = vmatpush.bf16.msra.mxu0 %v317
    %349 = vmatpush.bf16.msra.mxu0 %v314
    %350 = vmatpush.bf16.msra.mxu0 %v311
    %351 = vmatpush.bf16.msra.mxu0 %v308
    %352 = vmatpush.bf16.msra.mxu0 %v305
    %353 = vmatpush.bf16.msra.mxu0 %v302
    %354 = vmatpush.bf16.msra.mxu0 %v299
    %355 = vmatmul.bf16.gmra.mxu0 %v217
    %v356 = vpop.f32.mrf.mxu0
    %v357 = vadd.f32 %v207, %v356
    %v358 = vpop.f32.mrf.mxu0
    %v359 = vadd.f32 %v207, %v358
    %360 = vdwg.mxu0
    %361 = vmatpush.bf16.msra.mxu0 %v321
    %362 = vmatpush.bf16.msra.mxu0 %v318
    %363 = vmatpush.bf16.msra.mxu0 %v315
    %364 = vmatpush.bf16.msra.mxu0 %v312
    %365 = vmatpush.bf16.msra.mxu0 %v309
    %366 = vmatpush.bf16.msra.mxu0 %v306
    %367 = vmatpush.bf16.msra.mxu0 %v303
    %368 = vmatpush.bf16.msra.mxu0 %v300
    %369 = vmatmul.bf16.gmra.mxu0 %v217
    %v370 = vpop.f32.mrf.mxu0
    %v371 = vadd.f32 %v208, %v370
    %v372 = vpop.f32.mrf.mxu0
    %v373 = vadd.f32 %v208, %v372
    %374 = vdwg.mxu0
    %375 = vmatpush.bf16.msra.mxu0 %v322
    %376 = vmatpush.bf16.msra.mxu0 %v319
    %377 = vmatpush.bf16.msra.mxu0 %v316
    %378 = vmatpush.bf16.msra.mxu0 %v313
    %379 = vmatpush.bf16.msra.mxu0 %v310
    %380 = vmatpush.bf16.msra.mxu0 %v307
    %381 = vmatpush.bf16.msra.mxu0 %v304
    %382 = vmatpush.bf16.msra.mxu0 %v301
    %383 = vmatmul.bf16.gmra.mxu0 %v217
    %v384 = vpop.f32.mrf.mxu0
    %v385 = vadd.f32 %v209, %v384
    %v386 = vpop.f32.mrf.mxu0
    %v387 = vadd.f32 %v209, %v386
    %388 = vdwg.mxu0
    %v389 = vld [vmem:[%s4] sm:$0x1]
    %v390 = vxor.u32 %v357, 2147483648
    %v391 = vmul.f32 %v390, 1.442695
    %v392 = vpow.pop %v391
    %v393 = vadd.f32 %v392, 1.0
    %v394 = vrcp.pop %v393
    %v395 = vmul.f32 %v393, %v394
    %v396 = vsub.f32 1.0, %v395
    %v397 = vmul.f32 %v394, %v396
    %v398 = vadd.f32 %v394, %v397
    %vm399 = vweird.f32 %v393
    %vm400 = vweird.f32 %v394
    %vm401 = vmor %vm399, %vm400
    %v402 = vsel %vm401, %v394, %v398
    %v403 = vand.u32 2147483647, %v393
    %vm404 = vcmp.eq.f32.partialorder %v403, 8.507059e+37
    %v405 = vand.u32 %v393, 2147483648
    %v406 = vor.u32 1.1754944e-38, %v405
    %v407 = vsel %vm404, %v406, %v402
    %v408 = vmul.f32 1.0, %v407
    %v409 = vxor.u32 %v371, 2147483648
    %v410 = vmul.f32 %v409, 1.442695
    %v411 = vpow.pop %v410
    %v412 = vadd.f32 %v411, 1.0
    %v413 = vrcp.pop %v412
    %v414 = vmul.f32 %v412, %v413
    %v415 = vsub.f32 1.0, %v414
    %v416 = vmul.f32 %v413, %v415
    %v417 = vadd.f32 %v413, %v416
    %vm418 = vweird.f32 %v412
    %vm419 = vweird.f32 %v413
    %vm420 = vmor %vm418, %vm419
    %v421 = vsel %vm420, %v413, %v417
    %v422 = vand.u32 2147483647, %v412
    %vm423 = vcmp.eq.f32.partialorder %v422, 8.507059e+37
    %v424 = vand.u32 %v412, 2147483648
    %v425 = vor.u32 1.1754944e-38, %v424
    %v426 = vsel %vm423, %v425, %v421
    %v427 = vmul.f32 1.0, %v426
    %v429 = vperm.slane %v389, 0
    %v431 = vmul.f32 %v408, %v429
    %v432 = vadd.f32 %v385, %v431
    %v433 = vtanh.pop %v432
    %v434 = vsub.f32 1.0, %v427
    %v435 = vmul.f32 %v434, %v433
    %v436 = vld [vmem:[#allocation7] sm:$0xff]
    %v437 = vld [vmem:[#allocation7 + $0x8] sm:$0xf]
    %v438 = vld [vmem:[#allocation7 + $0xc] sm:$0xff]
    %v439 = vld [vmem:[#allocation7 + $0x14] sm:$0xf]
    %v440 = vld [vmem:[#allocation7 + $0x18] sm:$0xff]
    %v441 = vld [vmem:[#allocation7 + $0x20] sm:$0xf]
    %v442 = vld [vmem:[#allocation7 + $0x24] sm:$0xff]
    %v443 = vld [vmem:[#allocation7 + $0x2c] sm:$0xf]
    %v444 = vld [vmem:[#allocation7 + $0x30] sm:$0xff]
    %v445 = vld [vmem:[#allocation7 + $0x38] sm:$0xf]
    %v446 = vld [vmem:[#allocation7 + $0x3c] sm:$0xff]
    %v447 = vld [vmem:[#allocation7 + $0x44] sm:$0xf]
    %v448 = vld [vmem:[#allocation7 + $0x48] sm:$0xff]
    %v449 = vld [vmem:[#allocation7 + $0x50] sm:$0xf]
    %v450 = vld [vmem:[#allocation7 + $0x54] sm:$0xff]
    %v451 = vld [vmem:[#allocation7 + $0x5c] sm:$0xf]
    %v452 = vld [vmem:[#allocation7 + $0x60] sm:$0xff]
    %v453 = vld [vmem:[#allocation7 + $0x68] sm:$0xf]
    %v454 = vld [vmem:[#allocation7 + $0x6c] sm:$0xff]
    %v455 = vld [vmem:[#allocation7 + $0x74] sm:$0xf]
    %v456 = vld [vmem:[#allocation7 + $0x78] sm:$0xff]
    %v457 = vld [vmem:[#allocation7 + $0x80] sm:$0xf]
    %v458 = vld [vmem:[#allocation7 + $0x84] sm:$0xff]
    %v459 = vld [vmem:[#allocation7 + $0x8c] sm:$0xf]
    %v460 = vld [vmem:[#allocation7 + $0x90] sm:$0xff]
    %v461 = vld [vmem:[#allocation7 + $0x98] sm:$0xf]
    %v462 = vld [vmem:[#allocation7 + $0x9c] sm:$0xff]
    %v463 = vld [vmem:[#allocation7 + $0xa4] sm:$0xf]
    %v464 = vld [vmem:[#allocation7 + $0xa8] sm:$0xff]
    %v465 = vld [vmem:[#allocation7 + $0xb0] sm:$0xf]
    %v466 = vld [vmem:[#allocation7 + $0xb4] sm:$0xff]
    %v467 = vld [vmem:[#allocation7 + $0xbc] sm:$0xf]
    %v468 = vpack.c.bf16 %v435, %v435
    %v501 = vunpack.c.l.b16 %v436
    %v502 = vunpack.c.h.b16 %v436
    %v503 = vunpack.c.l.b16 %v437
    %v504 = vunpack.c.l.b16 %v438
    %v505 = vunpack.c.h.b16 %v438
    %v506 = vunpack.c.l.b16 %v439
    %v507 = vunpack.c.l.b16 %v440
    %v508 = vunpack.c.h.b16 %v440
    %v509 = vunpack.c.l.b16 %v441
    %v510 = vunpack.c.l.b16 %v442
    %v511 = vunpack.c.h.b16 %v442
    %v512 = vunpack.c.l.b16 %v443
    %v513 = vunpack.c.l.b16 %v444
    %v514 = vunpack.c.h.b16 %v444
    %v515 = vunpack.c.l.b16 %v445
    %v516 = vunpack.c.l.b16 %v446
    %v517 = vunpack.c.h.b16 %v446
    %v518 = vunpack.c.l.b16 %v447
    %v519 = vunpack.c.l.b16 %v448
    %v520 = vunpack.c.h.b16 %v448
    %v521 = vunpack.c.l.b16 %v449
    %v522 = vunpack.c.l.b16 %v450
    %v523 = vunpack.c.h.b16 %v450
    %v524 = vunpack.c.l.b16 %v451
    %v525 = vunpack.c.l.b16 %v452
    %v526 = vunpack.c.h.b16 %v452
    %v527 = vunpack.c.l.b16 %v453
    %v528 = vunpack.c.l.b16 %v454
    %v529 = vunpack.c.h.b16 %v454
    %v530 = vunpack.c.l.b16 %v455
    %v531 = vunpack.c.l.b16 %v456
    %v532 = vunpack.c.h.b16 %v456
    %v533 = vunpack.c.l.b16 %v457
    %v534 = vunpack.c.l.b16 %v458
    %v535 = vunpack.c.h.b16 %v458
    %v536 = vunpack.c.l.b16 %v459
    %v537 = vunpack.c.l.b16 %v460
    %v538 = vunpack.c.h.b16 %v460
    %v539 = vunpack.c.l.b16 %v461
    %v540 = vunpack.c.l.b16 %v462
    %v541 = vunpack.c.h.b16 %v462
    %v542 = vunpack.c.l.b16 %v463
    %v543 = vunpack.c.l.b16 %v464
    %v544 = vunpack.c.h.b16 %v464
    %v545 = vunpack.c.l.b16 %v465
    %v546 = vunpack.c.l.b16 %v466
    %v547 = vunpack.c.h.b16 %v466
    %v548 = vunpack.c.l.b16 %v467
    %v549 = vpack.c.b16 %v504, %v501
    %v550 = vpack.c.b16 %v505, %v502
    %v551 = vpack.c.b16 %v506, %v503
    %v552 = vpack.c.b16 %v510, %v507
    %v553 = vpack.c.b16 %v511, %v508
    %v554 = vpack.c.b16 %v512, %v509
    %v555 = vpack.c.b16 %v516, %v513
    %v556 = vpack.c.b16 %v517, %v514
    %v557 = vpack.c.b16 %v518, %v515
    %v558 = vpack.c.b16 %v522, %v519
    %v559 = vpack.c.b16 %v523, %v520
    %v560 = vpack.c.b16 %v524, %v521
    %v561 = vpack.c.b16 %v528, %v525
    %v562 = vpack.c.b16 %v529, %v526
    %v563 = vpack.c.b16 %v530, %v527
    %v564 = vpack.c.b16 %v534, %v531
    %v565 = vpack.c.b16 %v535, %v532
    %v566 = vpack.c.b16 %v536, %v533
    %v567 = vpack.c.b16 %v540, %v537
    %v568 = vpack.c.b16 %v541, %v538
    %v569 = vpack.c.b16 %v542, %v539
    %v570 = vpack.c.b16 %v546, %v543
    %v571 = vpack.c.b16 %v547, %v544
    %v572 = vpack.c.b16 %v548, %v545
    %597 = vmatpush.bf16.msra.mxu0 %v570
    %598 = vmatpush.bf16.msra.mxu0 %v567
    %599 = vmatpush.bf16.msra.mxu0 %v564
    %600 = vmatpush.bf16.msra.mxu0 %v561
    %601 = vmatpush.bf16.msra.mxu0 %v558
    %602 = vmatpush.bf16.msra.mxu0 %v555
    %603 = vmatpush.bf16.msra.mxu0 %v552
    %604 = vmatpush.bf16.msra.mxu0 %v549
    %605 = vmatmul.bf16.gmra.mxu0 %v468
    %v606 = vpop.f32.mrf.mxu0
    %v607 = vadd.f32 0.0, %v606
    %v608 = vpop.f32.mrf.mxu0
    %609 = vdwg.mxu0
    %610 = vmatpush.bf16.msra.mxu0 %v571
    %611 = vmatpush.bf16.msra.mxu0 %v568
    %612 = vmatpush.bf16.msra.mxu0 %v565
    %613 = vmatpush.bf16.msra.mxu0 %v562
    %614 = vmatpush.bf16.msra.mxu0 %v559
    %615 = vmatpush.bf16.msra.mxu0 %v556
    %616 = vmatpush.bf16.msra.mxu0 %v553
    %617 = vmatpush.bf16.msra.mxu0 %v550
    %618 = vmatmul.bf16.gmra.mxu0 %v468
    %v619 = vpop.f32.mrf.mxu0
    %v620 = vadd.f32 0.0, %v619
    %v621 = vpop.f32.mrf.mxu0
    %622 = vdwg.mxu0
    %623 = vmatpush.bf16.msra.mxu0 %v572
    %624 = vmatpush.bf16.msra.mxu0 %v569
    %625 = vmatpush.bf16.msra.mxu0 %v566
    %626 = vmatpush.bf16.msra.mxu0 %v563
    %627 = vmatpush.bf16.msra.mxu0 %v560
    %628 = vmatpush.bf16.msra.mxu0 %v557
    %629 = vmatpush.bf16.msra.mxu0 %v554
    %630 = vmatpush.bf16.msra.mxu0 %v551
    %631 = vmatmul.bf16.gmra.mxu0 %v468
    %v632 = vpop.f32.mrf.mxu0
    %v633 = vadd.f32 0.0, %v632
    %v634 = vpop.f32.mrf.mxu0
    %635 = vdwg.mxu0
    %v637 = vrot.slane %v607, 6
    %v639 = vadd.f32 %v357, %v637
    %v640 = vxor.u32 %v639, 2147483648
    %v641 = vmul.f32 %v640, 1.442695
    %v642 = vpow.pop %v641
    %v643 = vadd.f32 %v642, 1.0
    %v644 = vrcp.pop %v643
    %v645 = vmul.f32 %v643, %v644
    %v646 = vsub.f32 1.0, %v645
    %v647 = vmul.f32 %v644, %v646
    %v648 = vadd.f32 %v644, %v647
    %vm649 = vweird.f32 %v643
    %vm650 = vweird.f32 %v644
    %vm651 = vmor %vm649, %vm650
    %v652 = vsel %vm651, %v644, %v648
    %v653 = vand.u32 2147483647, %v643
    %vm654 = vcmp.eq.f32.partialorder %v653, 8.507059e+37
    %v655 = vand.u32 %v643, 2147483648
    %v656 = vor.u32 1.1754944e-38, %v655
    %v657 = vsel %vm654, %v656, %v652
    %v658 = vmul.f32 1.0, %v657
    %v660 = vrot.slane %v620, 6
    %v662 = vadd.f32 %v371, %v660
    %v663 = vxor.u32 %v662, 2147483648
    %v664 = vmul.f32 %v663, 1.442695
    %v665 = vpow.pop %v664
    %v666 = vadd.f32 %v665, 1.0
    %v667 = vrcp.pop %v666
    %v668 = vmul.f32 %v666, %v667
    %v669 = vsub.f32 1.0, %v668
    %v670 = vmul.f32 %v667, %v669
    %v671 = vadd.f32 %v667, %v670
    %vm672 = vweird.f32 %v666
    %vm673 = vweird.f32 %v667
    %vm674 = vmor %vm672, %vm673
    %v675 = vsel %vm674, %v667, %v671
    %v676 = vand.u32 2147483647, %v666
    %vm677 = vcmp.eq.f32.partialorder %v676, 8.507059e+37
    %v678 = vand.u32 %v666, 2147483648
    %v679 = vor.u32 1.1754944e-38, %v678
    %v680 = vsel %vm677, %v679, %v675
    %v681 = vmul.f32 1.0, %v680
    %v682 = vadd.f32 %v633, %v429
    %v684 = vrot.slane %v682, 6
    %v686 = vmul.f32 %v658, %v684
    %v687 = vadd.f32 %v385, %v686
    %v688 = vtanh.pop %v687
    %v689 = vsub.f32 1.0, %v681
    %v690 = vmul.f32 %v689, %v688
    %v692 = vrot.slane %v435, 6
    %v694 = vmul.f32 %v681, %v692
    %v695 = vadd.f32 %v690, %v694
    %v696 = vpack.c.bf16 %v695, %v695
    %v698 = vrot.slane %v696, 1
    %700 = vmatpush.bf16.msra.mxu0 %v570
    %701 = vmatpush.bf16.msra.mxu0 %v567
    %702 = vmatpush.bf16.msra.mxu0 %v564
    %703 = vmatpush.bf16.msra.mxu0 %v561
    %704 = vmatpush.bf16.msra.mxu0 %v558
    %705 = vmatpush.bf16.msra.mxu0 %v555
    %706 = vmatpush.bf16.msra.mxu0 %v552
    %707 = vmatpush.bf16.msra.mxu0 %v549
    %708 = vmatmul.bf16.gmra.mxu0 %v698
    %v709 = vpop.f32.mrf.mxu0
    %v710 = vadd.f32 0.0, %v709
    %v711 = vpop.f32.mrf.mxu0
    %712 = vdwg.mxu0
    %713 = vmatpush.bf16.msra.mxu0 %v571
    %714 = vmatpush.bf16.msra.mxu0 %v568
    %715 = vmatpush.bf16.msra.mxu0 %v565
    %716 = vmatpush.bf16.msra.mxu0 %v562
    %717 = vmatpush.bf16.msra.mxu0 %v559
    %718 = vmatpush.bf16.msra.mxu0 %v556
    %719 = vmatpush.bf16.msra.mxu0 %v553
    %720 = vmatpush.bf16.msra.mxu0 %v550
    %721 = vmatmul.bf16.gmra.mxu0 %v698
    %v722 = vpop.f32.mrf.mxu0
    %v723 = vadd.f32 0.0, %v722
    %v724 = vpop.f32.mrf.mxu0
    %725 = vdwg.mxu0
    %726 = vmatpush.bf16.msra.mxu0 %v572
    %727 = vmatpush.bf16.msra.mxu0 %v569
    %728 = vmatpush.bf16.msra.mxu0 %v566
    %729 = vmatpush.bf16.msra.mxu0 %v563
    %730 = vmatpush.bf16.msra.mxu0 %v560
    %731 = vmatpush.bf16.msra.mxu0 %v557
    %732 = vmatpush.bf16.msra.mxu0 %v554
    %733 = vmatpush.bf16.msra.mxu0 %v551
    %734 = vmatmul.bf16.gmra.mxu0 %v698
    %v735 = vpop.f32.mrf.mxu0
    %v736 = vadd.f32 0.0, %v735
    %v737 = vpop.f32.mrf.mxu0
    %738 = vdwg.mxu0
    %v740 = vrot.slane %v710, 4
    %v742 = vadd.f32 %v357, %v740
    %v743 = vxor.u32 %v742, 2147483648
    %v744 = vmul.f32 %v743, 1.442695
    %v745 = vpow.pop %v744
    %v746 = vadd.f32 %v745, 1.0
    %v747 = vrcp.pop %v746
    %v748 = vmul.f32 %v746, %v747
    %v749 = vsub.f32 1.0, %v748
    %v750 = vmul.f32 %v747, %v749
    %v751 = vadd.f32 %v747, %v750
    %vm752 = vweird.f32 %v746
    %vm753 = vweird.f32 %v747
    %vm754 = vmor %vm752, %vm753
    %v755 = vsel %vm754, %v747, %v751
    %v756 = vand.u32 2147483647, %v746
    %vm757 = vcmp.eq.f32.partialorder %v756, 8.507059e+37
    %v758 = vand.u32 %v746, 2147483648
    %v759 = vor.u32 1.1754944e-38, %v758
    %v760 = vsel %vm757, %v759, %v755
    %v761 = vmul.f32 1.0, %v760
    %v763 = vrot.slane %v723, 4
    %v765 = vadd.f32 %v371, %v763
    %v766 = vxor.u32 %v765, 2147483648
    %v767 = vmul.f32 %v766, 1.442695
    %v768 = vpow.pop %v767
    %v769 = vadd.f32 %v768, 1.0
    %v770 = vrcp.pop %v769
    %v771 = vmul.f32 %v769, %v770
    %v772 = vsub.f32 1.0, %v771
    %v773 = vmul.f32 %v770, %v772
    %v774 = vadd.f32 %v770, %v773
    %vm775 = vweird.f32 %v769
    %vm776 = vweird.f32 %v770
    %vm777 = vmor %vm775, %vm776
    %v778 = vsel %vm777, %v770, %v774
    %v779 = vand.u32 2147483647, %v769
    %vm780 = vcmp.eq.f32.partialorder %v779, 8.507059e+37
    %v781 = vand.u32 %v769, 2147483648
    %v782 = vor.u32 1.1754944e-38, %v781
    %v783 = vsel %vm780, %v782, %v778
    %v784 = vmul.f32 1.0, %v783
    %v785 = vadd.f32 %v736, %v429
    %v787 = vrot.slane %v785, 4
    %v789 = vmul.f32 %v761, %v787
    %v790 = vadd.f32 %v385, %v789
    %v791 = vtanh.pop %v790
    %v792 = vsub.f32 1.0, %v784
    %v793 = vmul.f32 %v792, %v791
    %v795 = vrot.slane %v695, 6
    %v797 = vmul.f32 %v784, %v795
    %v798 = vadd.f32 %v793, %v797
    %v799 = vpack.c.bf16 %v798, %v798
    %v801 = vrot.slane %v799, 2
    %803 = vmatpush.bf16.msra.mxu0 %v570
    %804 = vmatpush.bf16.msra.mxu0 %v567
    %805 = vmatpush.bf16.msra.mxu0 %v564
    %806 = vmatpush.bf16.msra.mxu0 %v561
    %807 = vmatpush.bf16.msra.mxu0 %v558
    %808 = vmatpush.bf16.msra.mxu0 %v555
    %809 = vmatpush.bf16.msra.mxu0 %v552
    %810 = vmatpush.bf16.msra.mxu0 %v549
    %811 = vmatmul.bf16.gmra.mxu0 %v801
    %v812 = vpop.f32.mrf.mxu0
    %v813 = vadd.f32 0.0, %v812
    %v814 = vpop.f32.mrf.mxu0
    %815 = vdwg.mxu0
    %816 = vmatpush.bf16.msra.mxu0 %v571
    %817 = vmatpush.bf16.msra.mxu0 %v568
    %818 = vmatpush.bf16.msra.mxu0 %v565
    %819 = vmatpush.bf16.msra.mxu0 %v562
    %820 = vmatpush.bf16.msra.mxu0 %v559
    %821 = vmatpush.bf16.msra.mxu0 %v556
    %822 = vmatpush.bf16.msra.mxu0 %v553
    %823 = vmatpush.bf16.msra.mxu0 %v550
    %824 = vmatmul.bf16.gmra.mxu0 %v801
    %v825 = vpop.f32.mrf.mxu0
    %v826 = vadd.f32 0.0, %v825
    %v827 = vpop.f32.mrf.mxu0
    %828 = vdwg.mxu0
    %829 = vmatpush.bf16.msra.mxu0 %v572
    %830 = vmatpush.bf16.msra.mxu0 %v569
    %831 = vmatpush.bf16.msra.mxu0 %v566
    %832 = vmatpush.bf16.msra.mxu0 %v563
    %833 = vmatpush.bf16.msra.mxu0 %v560
    %834 = vmatpush.bf16.msra.mxu0 %v557
    %835 = vmatpush.bf16.msra.mxu0 %v554
    %836 = vmatpush.bf16.msra.mxu0 %v551
    %837 = vmatmul.bf16.gmra.mxu0 %v801
    %v838 = vpop.f32.mrf.mxu0
    %v839 = vadd.f32 0.0, %v838
    %v840 = vpop.f32.mrf.mxu0
    %841 = vdwg.mxu0
    %v843 = vrot.slane %v813, 2
    %v845 = vadd.f32 %v357, %v843
    %v846 = vxor.u32 %v845, 2147483648
    %v847 = vmul.f32 %v846, 1.442695
    %v848 = vpow.pop %v847
    %v849 = vadd.f32 %v848, 1.0
    %v850 = vrcp.pop %v849
    %v851 = vmul.f32 %v849, %v850
    %v852 = vsub.f32 1.0, %v851
    %v853 = vmul.f32 %v850, %v852
    %v854 = vadd.f32 %v850, %v853
    %vm855 = vweird.f32 %v849
    %vm856 = vweird.f32 %v850
    %vm857 = vmor %vm855, %vm856
    %v858 = vsel %vm857, %v850, %v854
    %v859 = vand.u32 2147483647, %v849
    %vm860 = vcmp.eq.f32.partialorder %v859, 8.507059e+37
    %v861 = vand.u32 %v849, 2147483648
    %v862 = vor.u32 1.1754944e-38, %v861
    %v863 = vsel %vm860, %v862, %v858
    %v864 = vmul.f32 1.0, %v863
    %v866 = vrot.slane %v826, 2
    %v868 = vadd.f32 %v371, %v866
    %v869 = vxor.u32 %v868, 2147483648
    %v870 = vmul.f32 %v869, 1.442695
    %v871 = vpow.pop %v870
    %v872 = vadd.f32 %v871, 1.0
    %v873 = vrcp.pop %v872
    %v874 = vmul.f32 %v872, %v873
    %v875 = vsub.f32 1.0, %v874
    %v876 = vmul.f32 %v873, %v875
    %v877 = vadd.f32 %v873, %v876
    %vm878 = vweird.f32 %v872
    %vm879 = vweird.f32 %v873
    %vm880 = vmor %vm878, %vm879
    %v881 = vsel %vm880, %v873, %v877
    %v882 = vand.u32 2147483647, %v872
    %vm883 = vcmp.eq.f32.partialorder %v882, 8.507059e+37
    %v884 = vand.u32 %v872, 2147483648
    %v885 = vor.u32 1.1754944e-38, %v884
    %v886 = vsel %vm883, %v885, %v881
    %v887 = vmul.f32 1.0, %v886
    %v888 = vadd.f32 %v839, %v429
    %v890 = vrot.slane %v888, 2
    %v892 = vmul.f32 %v864, %v890
    %v893 = vadd.f32 %v385, %v892
    %v894 = vtanh.pop %v893
    %v895 = vsub.f32 1.0, %v887
    %v896 = vmul.f32 %v895, %v894
    %v898 = vrot.slane %v798, 6
    %v900 = vmul.f32 %v887, %v898
    %v901 = vadd.f32 %v896, %v900
    %v902 = vpack.c.bf16 %v901, %v901
    %v904 = vrot.slane %v902, 3
    %906 = vmatpush.bf16.msra.mxu0 %v570
    %907 = vmatpush.bf16.msra.mxu0 %v567
    %908 = vmatpush.bf16.msra.mxu0 %v564
    %909 = vmatpush.bf16.msra.mxu0 %v561
    %910 = vmatpush.bf16.msra.mxu0 %v558
    %911 = vmatpush.bf16.msra.mxu0 %v555
    %912 = vmatpush.bf16.msra.mxu0 %v552
    %913 = vmatpush.bf16.msra.mxu0 %v549
    %914 = vmatmul.bf16.gmra.mxu0 %v904
    %v915 = vpop.f32.mrf.mxu0
    %v916 = vadd.f32 0.0, %v915
    %v917 = vpop.f32.mrf.mxu0
    %918 = vdwg.mxu0
    %919 = vmatpush.bf16.msra.mxu0 %v571
    %920 = vmatpush.bf16.msra.mxu0 %v568
    %921 = vmatpush.bf16.msra.mxu0 %v565
    %922 = vmatpush.bf16.msra.mxu0 %v562
    %923 = vmatpush.bf16.msra.mxu0 %v559
    %924 = vmatpush.bf16.msra.mxu0 %v556
    %925 = vmatpush.bf16.msra.mxu0 %v553
    %926 = vmatpush.bf16.msra.mxu0 %v550
    %927 = vmatmul.bf16.gmra.mxu0 %v904
    %v928 = vpop.f32.mrf.mxu0
    %v929 = vadd.f32 0.0, %v928
    %v930 = vpop.f32.mrf.mxu0
    %931 = vdwg.mxu0
    %932 = vmatpush.bf16.msra.mxu0 %v572
    %933 = vmatpush.bf16.msra.mxu0 %v569
    %934 = vmatpush.bf16.msra.mxu0 %v566
    %935 = vmatpush.bf16.msra.mxu0 %v563
    %936 = vmatpush.bf16.msra.mxu0 %v560
    %937 = vmatpush.bf16.msra.mxu0 %v557
    %938 = vmatpush.bf16.msra.mxu0 %v554
    %939 = vmatpush.bf16.msra.mxu0 %v551
    %940 = vmatmul.bf16.gmra.mxu0 %v904
    %v941 = vpop.f32.mrf.mxu0
    %v942 = vadd.f32 0.0, %v941
    %v943 = vpop.f32.mrf.mxu0
    %944 = vdwg.mxu0
    %v945 = vadd.f32 %v359, %v916
    %v946 = vxor.u32 %v945, 2147483648
    %v947 = vmul.f32 %v946, 1.442695
    %v948 = vpow.pop %v947
    %v949 = vadd.f32 %v948, 1.0
    %v950 = vrcp.pop %v949
    %v951 = vmul.f32 %v949, %v950
    %v952 = vsub.f32 1.0, %v951
    %v953 = vmul.f32 %v950, %v952
    %v954 = vadd.f32 %v950, %v953
    %vm955 = vweird.f32 %v949
    %vm956 = vweird.f32 %v950
    %vm957 = vmor %vm955, %vm956
    %v958 = vsel %vm957, %v950, %v954
    %v959 = vand.u32 2147483647, %v949
    %vm960 = vcmp.eq.f32.partialorder %v959, 8.507059e+37
    %v961 = vand.u32 %v949, 2147483648
    %v962 = vor.u32 1.1754944e-38, %v961
    %v963 = vsel %vm960, %v962, %v958
    %v964 = vmul.f32 1.0, %v963
    %v965 = vadd.f32 %v373, %v929
    %v966 = vxor.u32 %v965, 2147483648
    %v967 = vmul.f32 %v966, 1.442695
    %v968 = vpow.pop %v967
    %v969 = vadd.f32 %v968, 1.0
    %v970 = vrcp.pop %v969
    %v971 = vmul.f32 %v969, %v970
    %v972 = vsub.f32 1.0, %v971
    %v973 = vmul.f32 %v970, %v972
    %v974 = vadd.f32 %v970, %v973
    %vm975 = vweird.f32 %v969
    %vm976 = vweird.f32 %v970
    %vm977 = vmor %vm975, %vm976
    %v978 = vsel %vm977, %v970, %v974
    %v979 = vand.u32 2147483647, %v969
    %vm980 = vcmp.eq.f32.partialorder %v979, 8.507059e+37
    %v981 = vand.u32 %v969, 2147483648
    %v982 = vor.u32 1.1754944e-38, %v981
    %v983 = vsel %vm980, %v982, %v978
    %v984 = vmul.f32 1.0, %v983
    %v985 = vadd.f32 %v942, %v429
    %v986 = vmul.f32 %v964, %v985
    %v987 = vadd.f32 %v387, %v986
    %v988 = vtanh.pop %v987
    %v989 = vsub.f32 1.0, %v984
    %v990 = vmul.f32 %v989, %v988
    %v992 = vrot.slane %v901, 6
    %v994 = vmul.f32 %v984, %v992
    %v995 = vadd.f32 %v990, %v994
    %v996 = vpack.c.bf16 %v995, %v995
    %997 = vmatpush.bf16.msra.mxu0 %v570
    %998 = vmatpush.bf16.msra.mxu0 %v567
    %999 = vmatpush.bf16.msra.mxu0 %v564
    %1000 = vmatpush.bf16.msra.mxu0 %v561
    %1001 = vmatpush.bf16.msra.mxu0 %v558
    %1002 = vmatpush.bf16.msra.mxu0 %v555
    %1003 = vmatpush.bf16.msra.mxu0 %v552
    %1004 = vmatpush.bf16.msra.mxu0 %v549
    %1005 = vmatmul.bf16.gmra.mxu0 %v996
    %v1006 = vpop.f32.mrf.mxu0
    %v1007 = vadd.f32 0.0, %v1006
    %v1008 = vpop.f32.mrf.mxu0
    %1009 = vdwg.mxu0
    %1010 = vmatpush.bf16.msra.mxu0 %v571
    %1011 = vmatpush.bf16.msra.mxu0 %v568
    %1012 = vmatpush.bf16.msra.mxu0 %v565
    %1013 = vmatpush.bf16.msra.mxu0 %v562
    %1014 = vmatpush.bf16.msra.mxu0 %v559
    %1015 = vmatpush.bf16.msra.mxu0 %v556
    %1016 = vmatpush.bf16.msra.mxu0 %v553
    %1017 = vmatpush.bf16.msra.mxu0 %v550
    %1018 = vmatmul.bf16.gmra.mxu0 %v996
    %v1019 = vpop.f32.mrf.mxu0
    %v1020 = vadd.f32 0.0, %v1019
    %v1021 = vpop.f32.mrf.mxu0
    %1022 = vdwg.mxu0
    %1023 = vmatpush.bf16.msra.mxu0 %v572
    %1024 = vmatpush.bf16.msra.mxu0 %v569
    %1025 = vmatpush.bf16.msra.mxu0 %v566
    %1026 = vmatpush.bf16.msra.mxu0 %v563
    %1027 = vmatpush.bf16.msra.mxu0 %v560
    %1028 = vmatpush.bf16.msra.mxu0 %v557
    %1029 = vmatpush.bf16.msra.mxu0 %v554
    %1030 = vmatpush.bf16.msra.mxu0 %v551
    %1031 = vmatmul.bf16.gmra.mxu0 %v996
    %v1032 = vpop.f32.mrf.mxu0
    %v1033 = vadd.f32 0.0, %v1032
    %v1034 = vpop.f32.mrf.mxu0
    %1035 = vdwg.mxu0
    %v1037 = vrot.slane %v1007, 6
    %v1039 = vadd.f32 %v359, %v1037
    %v1040 = vxor.u32 %v1039, 2147483648
    %v1041 = vmul.f32 %v1040, 1.442695
    %v1042 = vpow.pop %v1041
    %v1043 = vadd.f32 %v1042, 1.0
    %v1044 = vrcp.pop %v1043
    %v1045 = vmul.f32 %v1043, %v1044
    %v1046 = vsub.f32 1.0, %v1045
    %v1047 = vmul.f32 %v1044, %v1046
    %v1048 = vadd.f32 %v1044, %v1047
    %vm1049 = vweird.f32 %v1043
    %vm1050 = vweird.f32 %v1044
    %vm1051 = vmor %vm1049, %vm1050
    %v1052 = vsel %vm1051, %v1044, %v1048
    %v1053 = vand.u32 2147483647, %v1043
    %vm1054 = vcmp.eq.f32.partialorder %v1053, 8.507059e+37
    %v1055 = vand.u32 %v1043, 2147483648
    %v1056 = vor.u32 1.1754944e-38, %v1055
    %v1057 = vsel %vm1054, %v1056, %v1052
    %v1058 = vmul.f32 1.0, %v1057
    %v1060 = vrot.slane %v1020, 6
    %v1062 = vadd.f32 %v373, %v1060
    %v1063 = vxor.u32 %v1062, 2147483648
    %v1064 = vmul.f32 %v1063, 1.442695
    %v1065 = vpow.pop %v1064
    %v1066 = vadd.f32 %v1065, 1.0
    %v1067 = vrcp.pop %v1066
    %v1068 = vmul.f32 %v1066, %v1067
    %v1069 = vsub.f32 1.0, %v1068
    %v1070 = vmul.f32 %v1067, %v1069
    %v1071 = vadd.f32 %v1067, %v1070
    %vm1072 = vweird.f32 %v1066
    %vm1073 = vweird.f32 %v1067
    %vm1074 = vmor %vm1072, %vm1073
    %v1075 = vsel %vm1074, %v1067, %v1071
    %v1076 = vand.u32 2147483647, %v1066
    %vm1077 = vcmp.eq.f32.partialorder %v1076, 8.507059e+37
    %v1078 = vand.u32 %v1066, 2147483648
    %v1079 = vor.u32 1.1754944e-38, %v1078
    %v1080 = vsel %vm1077, %v1079, %v1075
    %v1081 = vmul.f32 1.0, %v1080
    %v1082 = vadd.f32 %v1033, %v429
    %v1084 = vrot.slane %v1082, 6
    %v1086 = vmul.f32 %v1058, %v1084
    %v1087 = vadd.f32 %v387, %v1086
    %v1088 = vtanh.pop %v1087
    %v1089 = vsub.f32 1.0, %v1081
    %v1090 = vmul.f32 %v1089, %v1088
    %v1092 = vrot.slane %v995, 6
    %v1094 = vmul.f32 %v1081, %v1092
    %v1095 = vadd.f32 %v1090, %v1094
    %v1096 = vpack.c.bf16 %v1095, %v1095
    %v1098 = vrot.slane %v1096, 1
    %1100 = vmatpush.bf16.msra.mxu0 %v570
    %1101 = vmatpush.bf16.msra.mxu0 %v567
    %1102 = vmatpush.bf16.msra.mxu0 %v564
    %1103 = vmatpush.bf16.msra.mxu0 %v561
    %1104 = vmatpush.bf16.msra.mxu0 %v558
    %1105 = vmatpush.bf16.msra.mxu0 %v555
    %1106 = vmatpush.bf16.msra.mxu0 %v552
    %1107 = vmatpush.bf16.msra.mxu0 %v549
    %1108 = vmatmul.bf16.gmra.mxu0 %v1098
    %v1109 = vpop.f32.mrf.mxu0
    %v1110 = vadd.f32 0.0, %v1109
    %v1111 = vpop.f32.mrf.mxu0
    %1112 = vdwg.mxu0
    %1113 = vmatpush.bf16.msra.mxu0 %v571
    %1114 = vmatpush.bf16.msra.mxu0 %v568
    %1115 = vmatpush.bf16.msra.mxu0 %v565
    %1116 = vmatpush.bf16.msra.mxu0 %v562
    %1117 = vmatpush.bf16.msra.mxu0 %v559
    %1118 = vmatpush.bf16.msra.mxu0 %v556
    %1119 = vmatpush.bf16.msra.mxu0 %v553
    %1120 = vmatpush.bf16.msra.mxu0 %v550
    %1121 = vmatmul.bf16.gmra.mxu0 %v1098
    %v1122 = vpop.f32.mrf.mxu0
    %v1123 = vadd.f32 0.0, %v1122
    %v1124 = vpop.f32.mrf.mxu0
    %1125 = vdwg.mxu0
    %1126 = vmatpush.bf16.msra.mxu0 %v572
    %1127 = vmatpush.bf16.msra.mxu0 %v569
    %1128 = vmatpush.bf16.msra.mxu0 %v566
    %1129 = vmatpush.bf16.msra.mxu0 %v563
    %1130 = vmatpush.bf16.msra.mxu0 %v560
    %1131 = vmatpush.bf16.msra.mxu0 %v557
    %1132 = vmatpush.bf16.msra.mxu0 %v554
    %1133 = vmatpush.bf16.msra.mxu0 %v551
    %1134 = vmatmul.bf16.gmra.mxu0 %v1098
    %v1135 = vpop.f32.mrf.mxu0
    %v1136 = vadd.f32 0.0, %v1135
    %v1137 = vpop.f32.mrf.mxu0
    %1138 = vdwg.mxu0
    %v1140 = vrot.slane %v1110, 4
    %v1142 = vadd.f32 %v359, %v1140
    %v1143 = vxor.u32 %v1142, 2147483648
    %v1144 = vmul.f32 %v1143, 1.442695
    %v1145 = vpow.pop %v1144
    %v1146 = vadd.f32 %v1145, 1.0
    %v1147 = vrcp.pop %v1146
    %v1148 = vmul.f32 %v1146, %v1147
    %v1149 = vsub.f32 1.0, %v1148
    %v1150 = vmul.f32 %v1147, %v1149
    %v1151 = vadd.f32 %v1147, %v1150
    %vm1152 = vweird.f32 %v1146
    %vm1153 = vweird.f32 %v1147
    %vm1154 = vmor %vm1152, %vm1153
    %v1155 = vsel %vm1154, %v1147, %v1151
    %v1156 = vand.u32 2147483647, %v1146
    %vm1157 = vcmp.eq.f32.partialorder %v1156, 8.507059e+37
    %v1158 = vand.u32 %v1146, 2147483648
    %v1159 = vor.u32 1.1754944e-38, %v1158
    %v1160 = vsel %vm1157, %v1159, %v1155
    %v1161 = vmul.f32 1.0, %v1160
    %v1163 = vrot.slane %v1123, 4
    %v1165 = vadd.f32 %v373, %v1163
    %v1166 = vxor.u32 %v1165, 2147483648
    %v1167 = vmul.f32 %v1166, 1.442695
    %v1168 = vpow.pop %v1167
    %v1169 = vadd.f32 %v1168, 1.0
    %v1170 = vrcp.pop %v1169
    %v1171 = vmul.f32 %v1169, %v1170
    %v1172 = vsub.f32 1.0, %v1171
    %v1173 = vmul.f32 %v1170, %v1172
    %v1174 = vadd.f32 %v1170, %v1173
    %vm1175 = vweird.f32 %v1169
    %vm1176 = vweird.f32 %v1170
    %vm1177 = vmor %vm1175, %vm1176
    %v1178 = vsel %vm1177, %v1170, %v1174
    %v1179 = vand.u32 2147483647, %v1169
    %vm1180 = vcmp.eq.f32.partialorder %v1179, 8.507059e+37
    %v1181 = vand.u32 %v1169, 2147483648
    %v1182 = vor.u32 1.1754944e-38, %v1181
    %v1183 = vsel %vm1180, %v1182, %v1178
    %v1184 = vmul.f32 1.0, %v1183
    %v1185 = vadd.f32 %v1136, %v429
    %v1187 = vrot.slane %v1185, 4
    %v1189 = vmul.f32 %v1161, %v1187
    %v1190 = vadd.f32 %v387, %v1189
    %v1191 = vtanh.pop %v1190
    %v1192 = vsub.f32 1.0, %v1184
    %v1193 = vmul.f32 %v1192, %v1191
    %v1195 = vrot.slane %v1095, 6
    %v1197 = vmul.f32 %v1184, %v1195
    %v1198 = vadd.f32 %v1193, %v1197
    %v1199 = vpack.c.bf16 %v1198, %v1198
    %v1201 = vrot.slane %v1199, 2
    %1203 = vmatpush.bf16.msra.mxu0 %v570
    %1204 = vmatpush.bf16.msra.mxu0 %v567
    %1205 = vmatpush.bf16.msra.mxu0 %v564
    %1206 = vmatpush.bf16.msra.mxu0 %v561
    %1207 = vmatpush.bf16.msra.mxu0 %v558
    %1208 = vmatpush.bf16.msra.mxu0 %v555
    %1209 = vmatpush.bf16.msra.mxu0 %v552
    %1210 = vmatpush.bf16.msra.mxu0 %v549
    %1211 = vmatmul.bf16.gmra.mxu0 %v1201
    %v1212 = vpop.f32.mrf.mxu0
    %v1213 = vadd.f32 0.0, %v1212
    %v1214 = vpop.f32.mrf.mxu0
    %1215 = vdwg.mxu0
    %1216 = vmatpush.bf16.msra.mxu0 %v571
    %1217 = vmatpush.bf16.msra.mxu0 %v568
    %1218 = vmatpush.bf16.msra.mxu0 %v565
    %1219 = vmatpush.bf16.msra.mxu0 %v562
    %1220 = vmatpush.bf16.msra.mxu0 %v559
    %1221 = vmatpush.bf16.msra.mxu0 %v556
    %1222 = vmatpush.bf16.msra.mxu0 %v553
    %1223 = vmatpush.bf16.msra.mxu0 %v550
    %1224 = vmatmul.bf16.gmra.mxu0 %v1201
    %v1225 = vpop.f32.mrf.mxu0
    %v1226 = vadd.f32 0.0, %v1225
    %v1227 = vpop.f32.mrf.mxu0
    %1228 = vdwg.mxu0
    %1229 = vmatpush.bf16.msra.mxu0 %v572
    %1230 = vmatpush.bf16.msra.mxu0 %v569
    %1231 = vmatpush.bf16.msra.mxu0 %v566
    %1232 = vmatpush.bf16.msra.mxu0 %v563
    %1233 = vmatpush.bf16.msra.mxu0 %v560
    %1234 = vmatpush.bf16.msra.mxu0 %v557
    %1235 = vmatpush.bf16.msra.mxu0 %v554
    %1236 = vmatpush.bf16.msra.mxu0 %v551
    %1237 = vmatmul.bf16.gmra.mxu0 %v1201
    %v1238 = vpop.f32.mrf.mxu0
    %v1239 = vadd.f32 0.0, %v1238
    %v1240 = vpop.f32.mrf.mxu0
    %1241 = vdwg.mxu0
    %v1243 = vrot.slane %v1213, 2
    %v1245 = vadd.f32 %v359, %v1243
    %v1246 = vxor.u32 %v1245, 2147483648
    %v1247 = vmul.f32 %v1246, 1.442695
    %v1248 = vpow.pop %v1247
    %v1249 = vadd.f32 %v1248, 1.0
    %v1250 = vrcp.pop %v1249
    %v1251 = vmul.f32 %v1249, %v1250
    %v1252 = vsub.f32 1.0, %v1251
    %v1253 = vmul.f32 %v1250, %v1252
    %v1254 = vadd.f32 %v1250, %v1253
    %vm1255 = vweird.f32 %v1249
    %vm1256 = vweird.f32 %v1250
    %vm1257 = vmor %vm1255, %vm1256
    %v1258 = vsel %vm1257, %v1250, %v1254
    %v1259 = vand.u32 2147483647, %v1249
    %vm1260 = vcmp.eq.f32.partialorder %v1259, 8.507059e+37
    %v1261 = vand.u32 %v1249, 2147483648
    %v1262 = vor.u32 1.1754944e-38, %v1261
    %v1263 = vsel %vm1260, %v1262, %v1258
    %v1264 = vmul.f32 1.0, %v1263
    %v1266 = vrot.slane %v1226, 2
    %v1268 = vadd.f32 %v373, %v1266
    %v1269 = vxor.u32 %v1268, 2147483648
    %v1270 = vmul.f32 %v1269, 1.442695
    %v1271 = vpow.pop %v1270
    %v1272 = vadd.f32 %v1271, 1.0
    %v1273 = vrcp.pop %v1272
    %v1274 = vmul.f32 %v1272, %v1273
    %v1275 = vsub.f32 1.0, %v1274
    %v1276 = vmul.f32 %v1273, %v1275
    %v1277 = vadd.f32 %v1273, %v1276
    %vm1278 = vweird.f32 %v1272
    %vm1279 = vweird.f32 %v1273
    %vm1280 = vmor %vm1278, %vm1279
    %v1281 = vsel %vm1280, %v1273, %v1277
    %v1282 = vand.u32 2147483647, %v1272
    %vm1283 = vcmp.eq.f32.partialorder %v1282, 8.507059e+37
    %v1284 = vand.u32 %v1272, 2147483648
    %v1285 = vor.u32 1.1754944e-38, %v1284
    %v1286 = vsel %vm1283, %v1285, %v1281
    %v1287 = vmul.f32 1.0, %v1286
    %v1288 = vadd.f32 %v1239, %v429
    %v1290 = vrot.slane %v1288, 2
    %v1292 = vmul.f32 %v1264, %v1290
    %v1293 = vadd.f32 %v387, %v1292
    %v1294 = vtanh.pop %v1293
    %v1295 = vsub.f32 1.0, %v1287
    %v1296 = vmul.f32 %v1295, %v1294
    %v1298 = vrot.slane %v1198, 6
    %v1300 = vmul.f32 %v1287, %v1298
    %v1301 = vadd.f32 %v1296, %v1300
    %v1302 = vld [vmem:[#allocation10] sm:$0xff]
    %v1303 = vld [vmem:[#allocation10 + $0x8] sm:$0xf]
    %v1304 = vld [vmem:[#allocation10 + $0xc] sm:$0xff]
    %v1305 = vld [vmem:[#allocation10 + $0x14] sm:$0xf]
    %v1306 = vld [vmem:[#allocation10 + $0x18] sm:$0xff]
    %v1307 = vld [vmem:[#allocation10 + $0x20] sm:$0xf]
    %v1308 = vld [vmem:[#allocation10 + $0x24] sm:$0xff]
    %v1309 = vld [vmem:[#allocation10 + $0x2c] sm:$0xf]
    %v1310 = vld [vmem:[#allocation10 + $0x30] sm:$0xff]
    %v1311 = vld [vmem:[#allocation10 + $0x38] sm:$0xf]
    %v1312 = vld [vmem:[#allocation10 + $0x3c] sm:$0xff]
    %v1313 = vld [vmem:[#allocation10 + $0x44] sm:$0xf]
    %v1314 = vld [vmem:[#allocation10 + $0x48] sm:$0xff]
    %v1315 = vld [vmem:[#allocation10 + $0x50] sm:$0xf]
    %v1316 = vld [vmem:[#allocation10 + $0x54] sm:$0xff]
    %v1317 = vld [vmem:[#allocation10 + $0x5c] sm:$0xf]
    %v1318 = vld [vmem:[#allocation10 + $0x60] sm:$0xff]
    %v1319 = vld [vmem:[#allocation10 + $0x68] sm:$0xf]
    %v1320 = vld [vmem:[#allocation10 + $0x6c] sm:$0xff]
    %v1321 = vld [vmem:[#allocation10 + $0x74] sm:$0xf]
    %v1322 = vld [vmem:[#allocation10 + $0x78] sm:$0xff]
    %v1323 = vld [vmem:[#allocation10 + $0x80] sm:$0xf]
    %v1324 = vld [vmem:[#allocation10 + $0x84] sm:$0xff]
    %v1325 = vld [vmem:[#allocation10 + $0x8c] sm:$0xf]
    %v1326 = vld [vmem:[#allocation10 + $0x90] sm:$0xff]
    %v1327 = vld [vmem:[#allocation10 + $0x98] sm:$0xf]
    %v1328 = vld [vmem:[#allocation10 + $0x9c] sm:$0xff]
    %v1329 = vld [vmem:[#allocation10 + $0xa4] sm:$0xf]
    %v1330 = vld [vmem:[#allocation10 + $0xa8] sm:$0xff]
    %v1331 = vld [vmem:[#allocation10 + $0xb0] sm:$0xf]
    %v1332 = vld [vmem:[#allocation10 + $0xb4] sm:$0xff]
    %v1333 = vld [vmem:[#allocation10 + $0xbc] sm:$0xf]
    %v1334 = vld [vmem:[%s6] sm:$0x7]
    %v1336 = vperm.slane %v1334, 0
    %v1337 = vperm.slane %v1334, 1
    %v1338 = vperm.slane %v1334, 2
    %v1342 = vpack.c.b16 %v216, %v216
    %v1343 = vrot.slane %v1342, 3
    %v1377 = vunpack.c.l.b16 %v1302
    %v1378 = vunpack.c.h.b16 %v1302
    %v1379 = vunpack.c.l.b16 %v1303
    %v1380 = vunpack.c.l.b16 %v1304
    %v1381 = vunpack.c.h.b16 %v1304
    %v1382 = vunpack.c.l.b16 %v1305
    %v1383 = vunpack.c.l.b16 %v1306
    %v1384 = vunpack.c.h.b16 %v1306
    %v1385 = vunpack.c.l.b16 %v1307
    %v1386 = vunpack.c.l.b16 %v1308
    %v1387 = vunpack.c.h.b16 %v1308
    %v1388 = vunpack.c.l.b16 %v1309
    %v1389 = vunpack.c.l.b16 %v1310
    %v1390 = vunpack.c.h.b16 %v1310
    %v1391 = vunpack.c.l.b16 %v1311
    %v1392 = vunpack.c.l.b16 %v1312
    %v1393 = vunpack.c.h.b16 %v1312
    %v1394 = vunpack.c.l.b16 %v1313
    %v1395 = vunpack.c.l.b16 %v1314
    %v1396 = vunpack.c.h.b16 %v1314
    %v1397 = vunpack.c.l.b16 %v1315
    %v1398 = vunpack.c.l.b16 %v1316
    %v1399 = vunpack.c.h.b16 %v1316
    %v1400 = vunpack.c.l.b16 %v1317
    %v1401 = vunpack.c.l.b16 %v1318
    %v1402 = vunpack.c.h.b16 %v1318
    %v1403 = vunpack.c.l.b16 %v1319
    %v1404 = vunpack.c.l.b16 %v1320
    %v1405 = vunpack.c.h.b16 %v1320
    %v1406 = vunpack.c.l.b16 %v1321
    %v1407 = vunpack.c.l.b16 %v1322
    %v1408 = vunpack.c.h.b16 %v1322
    %v1409 = vunpack.c.l.b16 %v1323
    %v1410 = vunpack.c.l.b16 %v1324
    %v1411 = vunpack.c.h.b16 %v1324
    %v1412 = vunpack.c.l.b16 %v1325
    %v1413 = vunpack.c.l.b16 %v1326
    %v1414 = vunpack.c.h.b16 %v1326
    %v1415 = vunpack.c.l.b16 %v1327
    %v1416 = vunpack.c.l.b16 %v1328
    %v1417 = vunpack.c.h.b16 %v1328
    %v1418 = vunpack.c.l.b16 %v1329
    %v1419 = vunpack.c.l.b16 %v1330
    %v1420 = vunpack.c.h.b16 %v1330
    %v1421 = vunpack.c.l.b16 %v1331
    %v1422 = vunpack.c.l.b16 %v1332
    %v1423 = vunpack.c.h.b16 %v1332
    %v1424 = vunpack.c.l.b16 %v1333
    %v1425 = vpack.c.b16 %v1380, %v1377
    %v1426 = vpack.c.b16 %v1381, %v1378
    %v1427 = vpack.c.b16 %v1382, %v1379
    %v1428 = vpack.c.b16 %v1386, %v1383
    %v1429 = vpack.c.b16 %v1387, %v1384
    %v1430 = vpack.c.b16 %v1388, %v1385
    %v1431 = vpack.c.b16 %v1392, %v1389
    %v1432 = vpack.c.b16 %v1393, %v1390
    %v1433 = vpack.c.b16 %v1394, %v1391
    %v1434 = vpack.c.b16 %v1398, %v1395
    %v1435 = vpack.c.b16 %v1399, %v1396
    %v1436 = vpack.c.b16 %v1400, %v1397
    %v1437 = vpack.c.b16 %v1404, %v1401
    %v1438 = vpack.c.b16 %v1405, %v1402
    %v1439 = vpack.c.b16 %v1406, %v1403
    %v1440 = vpack.c.b16 %v1410, %v1407
    %v1441 = vpack.c.b16 %v1411, %v1408
    %v1442 = vpack.c.b16 %v1412, %v1409
    %v1443 = vpack.c.b16 %v1416, %v1413
    %v1444 = vpack.c.b16 %v1417, %v1414
    %v1445 = vpack.c.b16 %v1418, %v1415
    %v1446 = vpack.c.b16 %v1422, %v1419
    %v1447 = vpack.c.b16 %v1423, %v1420
    %v1448 = vpack.c.b16 %v1424, %v1421
    %1473 = vmatpush.bf16.msra.mxu0 %v1446
    %1474 = vmatpush.bf16.msra.mxu0 %v1443
    %1475 = vmatpush.bf16.msra.mxu0 %v1440
    %1476 = vmatpush.bf16.msra.mxu0 %v1437
    %1477 = vmatpush.bf16.msra.mxu0 %v1434
    %1478 = vmatpush.bf16.msra.mxu0 %v1431
    %1479 = vmatpush.bf16.msra.mxu0 %v1428
    %1480 = vmatpush.bf16.msra.mxu0 %v1425
    %1481 = vmatmul.bf16.gmra.mxu0 %v1343
    %v1482 = vpop.f32.mrf.mxu0
    %v1483 = vadd.f32 %v1336, %v1482
    %v1484 = vpop.f32.mrf.mxu0
    %1485 = vdwg.mxu0
    %1486 = vmatpush.bf16.msra.mxu0 %v1447
    %1487 = vmatpush.bf16.msra.mxu0 %v1444
    %1488 = vmatpush.bf16.msra.mxu0 %v1441
    %1489 = vmatpush.bf16.msra.mxu0 %v1438
    %1490 = vmatpush.bf16.msra.mxu0 %v1435
    %1491 = vmatpush.bf16.msra.mxu0 %v1432
    %1492 = vmatpush.bf16.msra.mxu0 %v1429
    %1493 = vmatpush.bf16.msra.mxu0 %v1426
    %1494 = vmatmul.bf16.gmra.mxu0 %v1343
    %v1495 = vpop.f32.mrf.mxu0
    %v1496 = vadd.f32 %v1337, %v1495
    %v1497 = vpop.f32.mrf.mxu0
    %1498 = vdwg.mxu0
    %1499 = vmatpush.bf16.msra.mxu0 %v1448
    %1500 = vmatpush.bf16.msra.mxu0 %v1445
    %1501 = vmatpush.bf16.msra.mxu0 %v1442
    %1502 = vmatpush.bf16.msra.mxu0 %v1439
    %1503 = vmatpush.bf16.msra.mxu0 %v1436
    %1504 = vmatpush.bf16.msra.mxu0 %v1433
    %1505 = vmatpush.bf16.msra.mxu0 %v1430
    %1506 = vmatpush.bf16.msra.mxu0 %v1427
    %1507 = vmatmul.bf16.gmra.mxu0 %v1343
    %v1508 = vpop.f32.mrf.mxu0
    %v1509 = vadd.f32 %v1338, %v1508
    %v1510 = vpop.f32.mrf.mxu0
    %1511 = vdwg.mxu0
    %v1512 = vld [vmem:[%s7] sm:$0x1]
    %v1513 = vxor.u32 %v1483, 2147483648
    %v1514 = vmul.f32 %v1513, 1.442695
    %v1515 = vpow.pop %v1514
    %v1516 = vadd.f32 %v1515, 1.0
    %v1517 = vrcp.pop %v1516
    %v1518 = vmul.f32 %v1516, %v1517
    %v1519 = vsub.f32 1.0, %v1518
    %v1520 = vmul.f32 %v1517, %v1519
    %v1521 = vadd.f32 %v1517, %v1520
    %vm1522 = vweird.f32 %v1516
    %vm1523 = vweird.f32 %v1517
    %vm1524 = vmor %vm1522, %vm1523
    %v1525 = vsel %vm1524, %v1517, %v1521
    %v1526 = vand.u32 2147483647, %v1516
    %vm1527 = vcmp.eq.f32.partialorder %v1526, 8.507059e+37
    %v1528 = vand.u32 %v1516, 2147483648
    %v1529 = vor.u32 1.1754944e-38, %v1528
    %v1530 = vsel %vm1527, %v1529, %v1525
    %v1531 = vmul.f32 1.0, %v1530
    %v1532 = vxor.u32 %v1496, 2147483648
    %v1533 = vmul.f32 %v1532, 1.442695
    %v1534 = vpow.pop %v1533
    %v1535 = vadd.f32 %v1534, 1.0
    %v1536 = vrcp.pop %v1535
    %v1537 = vmul.f32 %v1535, %v1536
    %v1538 = vsub.f32 1.0, %v1537
    %v1539 = vmul.f32 %v1536, %v1538
    %v1540 = vadd.f32 %v1536, %v1539
    %vm1541 = vweird.f32 %v1535
    %vm1542 = vweird.f32 %v1536
    %vm1543 = vmor %vm1541, %vm1542
    %v1544 = vsel %vm1543, %v1536, %v1540
    %v1545 = vand.u32 2147483647, %v1535
    %vm1546 = vcmp.eq.f32.partialorder %v1545, 8.507059e+37
    %v1547 = vand.u32 %v1535, 2147483648
    %v1548 = vor.u32 1.1754944e-38, %v1547
    %v1549 = vsel %vm1546, %v1548, %v1544
    %v1550 = vmul.f32 1.0, %v1549
    %v1552 = vperm.slane %v1512, 0
    %v1554 = vmul.f32 %v1531, %v1552
    %v1555 = vadd.f32 %v1509, %v1554
    %v1556 = vtanh.pop %v1555
    %v1557 = vsub.f32 1.0, %v1550
    %v1558 = vmul.f32 %v1557, %v1556
    %v1559 = vpack.c.bf16 %v1301, %v1301
    %v1560 = vld [vmem:[#allocation11] sm:$0xf]
    %v1561 = vld [vmem:[#allocation11 + $0x4] sm:$0xf]
    %v1562 = vld [vmem:[#allocation11 + $0x8] sm:$0xf]
    %v1563 = vld [vmem:[#allocation11 + $0xc] sm:$0xf]
    %v1564 = vld [vmem:[#allocation11 + $0x10] sm:$0xf]
    %v1565 = vld [vmem:[#allocation11 + $0x14] sm:$0xf]
    %v1566 = vld [vmem:[#allocation11 + $0x18] sm:$0xf]
    %v1567 = vld [vmem:[#allocation11 + $0x1c] sm:$0xf]
    %v1568 = vld [vmem:[#allocation11 + $0x20] sm:$0xf]
    %v1569 = vld [vmem:[#allocation11 + $0x24] sm:$0xf]
    %v1570 = vld [vmem:[#allocation11 + $0x28] sm:$0xf]
    %v1571 = vld [vmem:[#allocation11 + $0x2c] sm:$0xf]
    %v1572 = vld [vmem:[#allocation11 + $0x30] sm:$0xf]
    %v1573 = vld [vmem:[#allocation11 + $0x34] sm:$0xf]
    %v1574 = vld [vmem:[#allocation11 + $0x38] sm:$0xf]
    %v1575 = vld [vmem:[#allocation11 + $0x3c] sm:$0xf]
    %v1576 = vpack.c.bf16 %v1558, %v1558
    %v1577 = vld [vmem:[#allocation13] sm:$0xf]
    %v1578 = vld [vmem:[#allocation13 + $0x4] sm:$0xf]
    %v1579 = vld [vmem:[#allocation13 + $0x8] sm:$0xf]
    %v1580 = vld [vmem:[#allocation13 + $0xc] sm:$0xf]
    %v1581 = vld [vmem:[#allocation13 + $0x10] sm:$0xf]
    %v1582 = vld [vmem:[#allocation13 + $0x14] sm:$0xf]
    %v1583 = vld [vmem:[#allocation13 + $0x18] sm:$0xf]
    %v1584 = vld [vmem:[#allocation13 + $0x1c] sm:$0xf]
    %v1585 = vld [vmem:[#allocation13 + $0x20] sm:$0xf]
    %v1586 = vld [vmem:[#allocation13 + $0x24] sm:$0xf]
    %v1587 = vld [vmem:[#allocation13 + $0x28] sm:$0xf]
    %v1588 = vld [vmem:[#allocation13 + $0x2c] sm:$0xf]
    %v1589 = vld [vmem:[#allocation13 + $0x30] sm:$0xf]
    %v1590 = vld [vmem:[#allocation13 + $0x34] sm:$0xf]
    %v1591 = vld [vmem:[#allocation13 + $0x38] sm:$0xf]
    %v1592 = vld [vmem:[#allocation13 + $0x3c] sm:$0xf]
    %v1609 = vunpack.c.l.b16 %v1577
    %v1610 = vunpack.c.l.b16 %v1578
    %v1611 = vunpack.c.l.b16 %v1579
    %v1612 = vunpack.c.l.b16 %v1580
    %v1613 = vunpack.c.l.b16 %v1581
    %v1614 = vunpack.c.l.b16 %v1582
    %v1615 = vunpack.c.l.b16 %v1583
    %v1616 = vunpack.c.l.b16 %v1584
    %v1617 = vunpack.c.l.b16 %v1585
    %v1618 = vunpack.c.l.b16 %v1586
    %v1619 = vunpack.c.l.b16 %v1587
    %v1620 = vunpack.c.l.b16 %v1588
    %v1621 = vunpack.c.l.b16 %v1589
    %v1622 = vunpack.c.l.b16 %v1590
    %v1623 = vunpack.c.l.b16 %v1591
    %v1624 = vunpack.c.l.b16 %v1592
    %v1625 = vpack.c.b16 %v1610, %v1609
    %v1626 = vpack.c.b16 %v1612, %v1611
    %v1627 = vpack.c.b16 %v1614, %v1613
    %v1628 = vpack.c.b16 %v1616, %v1615
    %v1629 = vpack.c.b16 %v1618, %v1617
    %v1630 = vpack.c.b16 %v1620, %v1619
    %v1631 = vpack.c.b16 %v1622, %v1621
    %v1632 = vpack.c.b16 %v1624, %v1623
    %1641 = vmatpush.bf16.msra.mxu0 %v1632
    %1642 = vmatpush.bf16.msra.mxu0 %v1631
    %1643 = vmatpush.bf16.msra.mxu0 %v1630
    %1644 = vmatpush.bf16.msra.mxu0 %v1629
    %1645 = vmatpush.bf16.msra.mxu0 %v1628
    %1646 = vmatpush.bf16.msra.mxu0 %v1627
    %1647 = vmatpush.bf16.msra.mxu0 %v1626
    %1648 = vmatpush.bf16.msra.mxu0 %v1625
    %1649 = vmatmul.bf16.gmra.mxu0 %v1576
    %v1650 = vpop.f32.mrf.mxu0
    %v1651 = vadd.f32 0.0, %v1650
    %v1652 = vpop.f32.mrf.mxu0
    %1653 = vdwg.mxu0
    %v1655 = vrot.slane %v1559, 3
    %v1673 = vunpack.c.l.b16 %v1560
    %v1674 = vunpack.c.l.b16 %v1561
    %v1675 = vunpack.c.l.b16 %v1562
    %v1676 = vunpack.c.l.b16 %v1563
    %v1677 = vunpack.c.l.b16 %v1564
    %v1678 = vunpack.c.l.b16 %v1565
    %v1679 = vunpack.c.l.b16 %v1566
    %v1680 = vunpack.c.l.b16 %v1567
    %v1681 = vunpack.c.l.b16 %v1568
    %v1682 = vunpack.c.l.b16 %v1569
    %v1683 = vunpack.c.l.b16 %v1570
    %v1684 = vunpack.c.l.b16 %v1571
    %v1685 = vunpack.c.l.b16 %v1572
    %v1686 = vunpack.c.l.b16 %v1573
    %v1687 = vunpack.c.l.b16 %v1574
    %v1688 = vunpack.c.l.b16 %v1575
    %v1689 = vpack.c.b16 %v1674, %v1673
    %v1690 = vpack.c.b16 %v1676, %v1675
    %v1691 = vpack.c.b16 %v1678, %v1677
    %v1692 = vpack.c.b16 %v1680, %v1679
    %v1693 = vpack.c.b16 %v1682, %v1681
    %v1694 = vpack.c.b16 %v1684, %v1683
    %v1695 = vpack.c.b16 %v1686, %v1685
    %v1696 = vpack.c.b16 %v1688, %v1687
    %1705 = vmatpush.bf16.msra.mxu0 %v1696
    %1706 = vmatpush.bf16.msra.mxu0 %v1695
    %1707 = vmatpush.bf16.msra.mxu0 %v1694
    %1708 = vmatpush.bf16.msra.mxu0 %v1693
    %1709 = vmatpush.bf16.msra.mxu0 %v1692
    %1710 = vmatpush.bf16.msra.mxu0 %v1691
    %1711 = vmatpush.bf16.msra.mxu0 %v1690
    %1712 = vmatpush.bf16.msra.mxu0 %v1689
    %1713 = vmatmul.bf16.gmra.mxu0 %v1655
    %v1714 = vpop.f32.mrf.mxu0
    %v1715 = vadd.f32 %v1651, %v1714
    %v1716 = vpop.f32.mrf.mxu0
    %1717 = vdwg.mxu0
    %v1718 = vld [vmem:[%s10] sm:$0x1]
    %v1720 = vperm.slane %v1718, 0
    %v1722 = vadd.f32 %v1715, %v1720
    %v1723 = vtanh.pop %v1722
    %v1724 = vpack.c.bf16 %v1723, %v1723
    %v1725 = vld [vmem:[#allocation14] sm:$0xf]
    %v1726 = vld [vmem:[#allocation14 + $0x4] sm:$0xf]
    %v1727 = vld [vmem:[#allocation14 + $0x8] sm:$0xf]
    %v1728 = vld [vmem:[#allocation14 + $0xc] sm:$0xf]
    %v1729 = vld [vmem:[#allocation14 + $0x10] sm:$0xf]
    %v1730 = vld [vmem:[#allocation14 + $0x14] sm:$0xf]
    %v1731 = vld [vmem:[#allocation14 + $0x18] sm:$0xf]
    %v1732 = vld [vmem:[#allocation14 + $0x1c] sm:$0xf]
    %v1733 = vld [vmem:[#allocation14 + $0x20] sm:$0xf]
    %v1734 = vld [vmem:[#allocation14 + $0x24] sm:$0xf]
    %v1735 = vld [vmem:[#allocation14 + $0x28] sm:$0xf]
    %v1736 = vld [vmem:[#allocation14 + $0x2c] sm:$0xf]
    %v1737 = vld [vmem:[#allocation14 + $0x30] sm:$0xf]
    %v1738 = vld [vmem:[#allocation14 + $0x34] sm:$0xf]
    %v1739 = vld [vmem:[#allocation14 + $0x38] sm:$0xf]
    %v1740 = vld [vmem:[#allocation14 + $0x3c] sm:$0xf]
    %v1741 = vld [vmem:[%s12] sm:$0x1]
    %v1743 = vperm.slane %v1741, 0
    %v1761 = vunpack.c.l.b16 %v1725
    %v1762 = vunpack.c.l.b16 %v1726
    %v1763 = vunpack.c.l.b16 %v1727
    %v1764 = vunpack.c.l.b16 %v1728
    %v1765 = vunpack.c.l.b16 %v1729
    %v1766 = vunpack.c.l.b16 %v1730
    %v1767 = vunpack.c.l.b16 %v1731
    %v1768 = vunpack.c.l.b16 %v1732
    %v1769 = vunpack.c.l.b16 %v1733
    %v1770 = vunpack.c.l.b16 %v1734
    %v1771 = vunpack.c.l.b16 %v1735
    %v1772 = vunpack.c.l.b16 %v1736
    %v1773 = vunpack.c.l.b16 %v1737
    %v1774 = vunpack.c.l.b16 %v1738
    %v1775 = vunpack.c.l.b16 %v1739
    %v1776 = vunpack.c.l.b16 %v1740
    %v1777 = vpack.c.b16 %v1762, %v1761
    %v1778 = vpack.c.b16 %v1764, %v1763
    %v1779 = vpack.c.b16 %v1766, %v1765
    %v1780 = vpack.c.b16 %v1768, %v1767
    %v1781 = vpack.c.b16 %v1770, %v1769
    %v1782 = vpack.c.b16 %v1772, %v1771
    %v1783 = vpack.c.b16 %v1774, %v1773
    %v1784 = vpack.c.b16 %v1776, %v1775
    %1793 = vmatpush.bf16.msra.mxu0 %v1784
    %1794 = vmatpush.bf16.msra.mxu0 %v1783
    %1795 = vmatpush.bf16.msra.mxu0 %v1782
    %1796 = vmatpush.bf16.msra.mxu0 %v1781
    %1797 = vmatpush.bf16.msra.mxu0 %v1780
    %1798 = vmatpush.bf16.msra.mxu0 %v1779
    %1799 = vmatpush.bf16.msra.mxu0 %v1778
    %1800 = vmatpush.bf16.msra.mxu0 %v1777
    %1801 = vmatmul.bf16.gmra.mxu0 %v1724
    %v1802 = vpop.f32.mrf.mxu0
    %v1803 = vadd.f32 %v1743, %v1802
    %v1804 = vpop.f32.mrf.mxu0
    %1805 = vdwg.mxu0
    %1806 = vst [vmem:[#allocation16] sm:$0x3] %v1803
    %vm1807 = vcmask 1041408
    %v1808 = vsel %vm1807, %v1803, -inf
    %1809 = vmax.xlane.f32.xlu0 %v1808
    %v1810 = vpop.xlane.xlu0 %1809
    %v1811 = vsub.f32 %v1803, %v1810
    %v1812 = vmul.f32 %v1811, 1.442695
    %v1813 = vpow.pop %v1812
    %v1814 = vsel %vm1807, %v1813, 0.0
    %1815 = vadd.xlane.f32.xlu0 %v1814
    %v1816 = vpop.xlane.xlu0 %1815
    %v1817 = vrcp.pop %v1816
    %v1818 = vmul.f32 %v1813, %v1817
    %1819 = vst [vmem:[#allocation17] sm:$0x3] %v1818
    // Predicated region
    $region86: #{tpu_custom_call.1} parent=1 // pred_check
      _
    $region87: #{tpu_custom_call.1} parent=1 // pred_check_branch
      %1821 = sbr.rel (0) target = $region89
    $region88: #{tpu_custom_call.1} parent=1 // pred_region
      %1823 = vsyncadd [#allocation4], 0
      %s1825 = sshll.u32 [#allocation16], 4
      %s1826 = int_to_ptr.vmem [resolvable:$true] %s1825
      %s1827 = sshll.u32 %s13, 4
      %s1828 = int_to_ptr.hbm [resolvable:$true] %s1827
      %1830 = dma.vmem_to_hbm [thread:$0]  %s1826, 32, %s1828, [#allocation4]
    $region89: #{tpu_custom_call.1} parent=1 // pred_fallthru
      _
    // Predicated region
    $region90: #{tpu_custom_call.1} parent=1 // pred_check
      _
    $region91: #{tpu_custom_call.1} parent=1 // pred_check_branch
      %1832 = sbr.rel (0) target = $region93
    $region92: #{tpu_custom_call.1} parent=1 // pred_region
      %1834 = vsyncadd [#allocation18], 0
      %s1836 = sshll.u32 [#allocation17], 4
      %s1837 = int_to_ptr.vmem [resolvable:$true] %s1836
      %s1838 = sshll.u32 %s14, 4
      %s1839 = int_to_ptr.hbm [resolvable:$true] %s1838
      %1841 = dma.vmem_to_hbm [thread:$0]  %s1837, 32, %s1839, [#allocation18]
    $region93: #{tpu_custom_call.1} parent=1 // pred_fallthru
      _
    // Predicated region
    $region94: #{tpu_custom_call.1} parent=1 // pred_check
      _
    $region95: #{tpu_custom_call.1} parent=1 // pred_check_branch
      %1843 = sbr.rel (0) target = $region97
    $region96: #{tpu_custom_call.1} parent=1 // pred_region
      %1845 = dma.done [#allocation4], 32
    $region97: #{tpu_custom_call.1} parent=1 // pred_fallthru
      _
    // Predicated region
    $region98: #{tpu_custom_call.1} parent=1 // pred_check
      _
    $region99: #{tpu_custom_call.1} parent=1 // pred_check_branch
      %1847 = sbr.rel (0) target = $region101
    $region100: #{tpu_custom_call.1} parent=1 // pred_region
      %1849 = dma.done [#allocation18], 32
    $region101: #{tpu_custom_call.1} parent=1 // pred_fallthru
      _
    %1850 = vsyncpa [#allocation3], 1
    %1851 = vsyncpa [#allocation6], 1
    %1852 = vsyncpa [#allocation9], 1
    %1853 = vsyncpa [#allocation12], 1
    %1854 = vsyncpa [#allocation15], 1
    %1855 = vsyncpa [#allocation4], 1
    %1856 = vsyncpa [#allocation18], 1

</llo_original>
